<compile_context>
chip_gen: v5e
topology: v5e:2x2
jax: 0.10.0
libtpu: 0.0.40
codegen_flags: <defaults>
</compile_context>

<pallas_src>
import functools
import math

import jax
import jax.numpy as jnp
from jax import lax
from jax.experimental import pallas as pl
from jax.experimental.pallas import tpu as pltpu


# Above the 16/32 MiB scoped defaults (v5e / v6e+v7x), below v7x's 64 MiB
# physical per-TensorCore VMEM.
_VMEM_LIMIT = 48 * 1024 * 1024
_RESIDENT_W_BYTES = 8 * 1024 * 1024   # keep weights VMEM-resident below this


# ------------------------------------------------------------------
# tiling helpers
# ------------------------------------------------------------------
def _round_up(x, m):
    return (x + m - 1) // m * m


def _choose_tm(m):
    """Row tile: largest of 1024/512/256/128 dividing m, preferring >=2 tiles
    (row axis is 'parallel' -> v7x's 2 TensorCores).  Fallback: one tile
    rounded to a multiple of 16 (bf16 sublane packing)."""
    for tm in (1024, 512, 256, 128):
        if m % tm == 0 and m // tm >= 2:
            return tm
    for tm in (1024, 512, 256, 128):
        if m % tm == 0:
            return tm
    return max(16, _round_up(min(m, 1024), 16))


def _choose_tk(k):
    """K tile that keeps the 256-wide v6e/v7x MXU filled; K is padded at
    pack/patch-build time so one of these divides it."""
    if k <= 512:
        return k
    for tk in (512, 384, 256):
        if k % tk == 0:
            return tk
    return 128


def _k_tiling(k_raw):
    """Pad the reduction dim so _choose_tk never degrades to 128."""
    kp = _round_up(k_raw, 128)
    if kp <= 512:
        return kp, kp
    for tk in (512, 384, 256):
        if kp % tk == 0:
            return kp, tk
    return _round_up(kp, 512), 512


def _choose_tb(n, rows_per_image, target=1024):
    """Images per grid step for the implicit-GEMM conv: aim for ~1024 MXU rows
    per step and keep >=2 grid steps when possible (v7x megacore)."""
    best = 1
    for tb in range(1, n + 1):
        if n % tb == 0 and tb * rows_per_image <= target:
            best = tb
    if best == n and n > 1:
        for tb in range(n // 2, 0, -1):
            if n % tb == 0:
                return tb
    return best


# ------------------------------------------------------------------
# Kernel 1: K-tiled matmul (stage A when stride > 1), f32 accumulator scratch,
#           optional fused per-output-channel affine+ReLU epilogue.
# ------------------------------------------------------------------
def _make_matmul_kernel(*, has_epi, resident_w, tk):
    def kernel(*refs):
        it = iter(refs)
        p_ref = next(it)
        w_ref = next(it)
        if has_epi:
            es_ref = next(it)
            eb_ref = next(it)
        o_ref = next(it)
        acc_ref = next(it)

        k = pl.program_id(1)

        @pl.when(k == 0)
        def _init():
            acc_ref[...] = jnp.zeros_like(acc_ref)

        if resident_w:
            w = w_ref[pl.ds(pl.multiple_of(k * tk, tk), tk), :]
        else:
            w = w_ref[...]
        acc_ref[...] += jnp.dot(p_ref[...], w,
                                preferred_element_type=jnp.float32)

        @pl.when(k == pl.num_programs(1) - 1)
        def _fin():
            acc = acc_ref[...]
            if has_epi:
                acc = jnp.maximum(acc * es_ref[...] + eb_ref[...], 0.0)
            o_ref[...] = acc.astype(o_ref.dtype)

    return kernel


def fused_matmul(patches, w, *, epilogue=None, out_dtype=jnp.float32):
    """(M, K) @ (K, Np) on the MXU, K-tiled f32 accumulation.  Weights stay
    VMEM-resident (constant index_map -> DMA'd once) when they fit."""
    M, K = patches.shape
    K2, Np = w.shape
    assert K == K2 and K % 128 == 0 and Np % 128 == 0, (K, K2, Np)

    TM = _choose_tm(M)
    TK = _choose_tk(K)
    Mp = _round_up(M, TM)
    if Mp != M:
        # TODO(synk): build patches at Mp rows so XLA fuses this pad away.
        patches = jnp.pad(patches, ((0, Mp - M), (0, 0)))
    grid = (Mp // TM, K // TK)

    resident_w = K * Np * 2 <= _RESIDENT_W_BYTES
    if resident_w:
        w_spec = pl.BlockSpec((K, Np), lambda i, k: (0, 0))
    else:
        w_spec = pl.BlockSpec((TK, Np), lambda i, k: (k, 0))

    # TODO(synk): if the patch-stream DMA is still exposed after these changes,
    #             add pipeline_mode=pl.Buffered(3) on the patches BlockSpec.
    in_specs = [pl.BlockSpec((TM, TK), lambda i, k: (i, k)), w_spec]
    args = [patches, w]
    if epilogue is not None:
        es, eb = epilogue
        in_specs += [pl.BlockSpec((1, Np), lambda i, k: (0, 0)),
                     pl.BlockSpec((1, Np), lambda i, k: (0, 0))]
        args += [es.reshape(1, Np).astype(jnp.float32),
                 eb.reshape(1, Np).astype(jnp.float32)]

    kernel = _make_matmul_kernel(has_epi=epilogue is not None,
                                 resident_w=resident_w, tk=TK)
    out = pl.pallas_call(
        kernel,
        out_shape=jax.ShapeDtypeStruct((Mp, Np), out_dtype),
        grid=grid,
        in_specs=in_specs,
        out_specs=pl.BlockSpec((TM, Np), lambda i, k: (i, 0)),
        scratch_shapes=[pltpu.VMEM((TM, Np), jnp.float32)],
        compiler_params=pltpu.CompilerParams(
            dimension_semantics=("parallel", "arbitrary"),
            vmem_limit_bytes=_VMEM_LIMIT),
    )(*args)
    return out[:M]


# ------------------------------------------------------------------
# Kernel 2: 3x3 stride-1 conv as an in-kernel implicit GEMM.
#   One grid step = TB images; the halo'd (TB, Ho+2, Wo+2, Cp) tile is DMA'd
#   once and the 9 taps are static slices of it (9 MXU dots), optionally
#   preceded by a folded 1x1 shortcut dot or an identity residual, optionally
#   followed by a fused affine+ReLU epilogue.
# ------------------------------------------------------------------
def _make_conv3x3_kernel(*, has_epi, has_sc, has_res, tb, ho, wo, np_):
    rows = tb * ho * wo

    def kernel(*refs):
        it = iter(refs)
        x_ref = next(it)
        w_ref = next(it)
        if has_sc:
            sc_ref = next(it)
            wsc_ref = next(it)
        if has_res:
            res_ref = next(it)
        if has_epi:
            es_ref = next(it)
            eb_ref = next(it)
        o_ref = next(it)

        if has_res:
            acc = res_ref[...].astype(jnp.float32).reshape(rows, np_)
        elif has_sc:
            acc = jnp.dot(sc_ref[...].reshape(rows, -1), wsc_ref[...],
                          preferred_element_type=jnp.float32)
        else:
            acc = jnp.zeros((rows, np_), jnp.float32)

        for kh in range(3):
            for kw in range(3):
                tap = x_ref[:, kh:kh + ho, kw:kw + wo, :].reshape(rows, -1)
                acc = acc + jnp.dot(tap, w_ref[kh * 3 + kw],
                                    preferred_element_type=jnp.float32)

        if has_epi:
            acc = jnp.maximum(acc * es_ref[...] + eb_ref[...], 0.0)
        o_ref[...] = acc.reshape(tb, ho, wo, np_).astype(o_ref.dtype)

    return kernel


def conv3x3_implicit(xpad, w_taps, *, epilogue=None, shortcut=None,
                     residual=None, out_dtype=jnp.float32):
    """xpad: (N, Ho+2, Wo+2, Cp) bf16 zero-padded; w_taps: (9, Cp, Np) bf16.
    shortcut=(xsc (N,Ho,Wo,Csc) bf16, wsc (Csc,Np) bf16) folds a 1x1 conv into
    the accumulator init; residual=(N,Ho,Wo,Np) f32 initializes it instead."""
    N, Hp, Wp, Cp = xpad.shape
    Ho, Wo = Hp - 2, Wp - 2
    Np = w_taps.shape[-1]
    assert Cp % 128 == 0 and Np % 128 == 0, (Cp, Np)
    TB = _choose_tb(N, Ho * Wo)
    grid = (N // TB,)

    in_specs = [pl.BlockSpec((TB, Hp, Wp, Cp), lambda i: (i, 0, 0, 0)),
                pl.BlockSpec((9, Cp, Np), lambda i: (0, 0, 0))]   # resident
    args = [xpad, w_taps]
    if shortcut is not None:
        xsc, wsc = shortcut
        Csc = xsc.shape[-1]
        in_specs += [pl.BlockSpec((TB, Ho, Wo, Csc), lambda i: (i, 0, 0, 0)),
                     pl.BlockSpec((Csc, Np), lambda i: (0, 0))]
        args += [xsc, wsc]
    if residual is not None:
        in_specs.append(pl.BlockSpec((TB, Ho, Wo, Np), lambda i: (i, 0, 0, 0)))
        args.append(residual.astype(jnp.float32))
    if epilogue is not None:
        es, eb = epilogue
        in_specs += [pl.BlockSpec((1, Np), lambda i: (0, 0)),
                     pl.BlockSpec((1, Np), lambda i: (0, 0))]
        args += [es.reshape(1, Np).astype(jnp.float32),
                 eb.reshape(1, Np).astype(jnp.float32)]

    kernel = _make_conv3x3_kernel(has_epi=epilogue is not None,
                                  has_sc=shortcut is not None,
                                  has_res=residual is not None,
                                  tb=TB, ho=Ho, wo=Wo, np_=Np)
    return pl.pallas_call(
        kernel,
        out_shape=jax.ShapeDtypeStruct((N, Ho, Wo, Np), out_dtype),
        grid=grid,
        in_specs=in_specs,
        out_specs=pl.BlockSpec((TB, Ho, Wo, Np), lambda i: (i, 0, 0, 0)),
        compiler_params=pltpu.CompilerParams(
            dimension_semantics=("parallel",),
            vmem_limit_bytes=_VMEM_LIMIT),
    )(*args)


# ------------------------------------------------------------------
# XLA-level glue: BN folding, weight packing, im2col (stride>1 conv1 only)
# ------------------------------------------------------------------
def bn_affine(gamma, beta, mean, var, eps=1e-5):
    scale = gamma / jnp.sqrt(var + eps)
    return scale, beta - mean * scale


def _im2col(xp, k, stride, out_h, out_w, extra_cols=0):
    """Pre-padded NHWC -> (N*out_h*out_w, k*k*C [+extra zero cols]), (kh,kw,c)."""
    N = xp.shape[0]
    cols = []
    for kh in range(k):
        for kw in range(k):
            cols.append(xp[:, kh:kh + (out_h - 1) * stride + 1:stride,
                              kw:kw + (out_w - 1) * stride + 1:stride, :])
    if extra_cols:
        cols.append(jnp.zeros(cols[0].shape[:3] + (extra_cols,), xp.dtype))
    cols = jnp.concatenate(cols, axis=-1)
    return cols.reshape(N * out_h * out_w, cols.shape[-1])


def pack_params(params, stride, eps=1e-5):
    """Hoisted out of the traced forward: fold BN, transpose/pad/bf16 weights."""
    w1 = params["w1"]
    out_planes, in_planes = int(w1.shape[0]), int(w1.shape[1])
    Npad = _round_up(out_planes, 128)
    Cinp = _round_up(in_planes, 128)

    s1, b1 = bn_affine(params["bn1_gamma"], params["bn1_beta"],
                       params["bn1_mean"], params["bn1_var"], eps)
    s2, b2 = bn_affine(params["bn2_gamma"], params["bn2_beta"],
                       params["bn2_mean"], params["bn2_var"], eps)

    packed = {"s1": s1, "b1": b1,
              "es": jnp.pad(s2, (0, Npad - out_planes)).reshape(1, Npad),
              "eb": jnp.pad(b2, (0, Npad - out_planes)).reshape(1, Npad)}

    w1t = jnp.transpose(w1, (2, 3, 1, 0))                     # (3,3,Cin,Cout)
    if stride == 1:
        w1p = jnp.pad(w1t, ((0, 0), (0, 0),
                            (0, Cinp - in_planes), (0, Npad - out_planes)))
        packed["w1_taps"] = w1p.reshape(9, Cinp, Npad).astype(jnp.bfloat16)
    else:
        K1 = 9 * in_planes
        K1p, _ = _k_tiling(K1)
        w1m = w1t.reshape(K1, out_planes)
        w1m = jnp.pad(w1m, ((0, K1p - K1), (0, Npad - out_planes)))
        packed["w1_mm"] = w1m.astype(jnp.bfloat16)

    w2t = jnp.transpose(params["w2"], (2, 3, 1, 0))            # (3,3,Cout,Cout)
    w2p = jnp.pad(w2t, ((0, 0), (0, 0),
                        (0, Npad - out_planes), (0, Npad - out_planes)))
    packed["w2_taps"] = w2p.reshape(9, Npad, Npad).astype(jnp.bfloat16)

    if "wsc" in params:
        wscm = jnp.transpose(params["wsc"][:, :, 0, 0])        # (Cin, Cout)
        wscm = jnp.pad(wscm, ((0, Cinp - in_planes), (0, Npad - out_planes)))
        packed["wsc"] = wscm.astype(jnp.bfloat16)
    return packed


def init_params(key, in_planes, out_planes):
    ks = jax.random.split(key, 11)

    def conv_init(k, cout, cin, kh, kw):
        fan = cin * kh * kw
        return jax.random.normal(k, (cout, cin, kh, kw), jnp.float32) * math.sqrt(2.0 / fan)

    p = {"w1": conv_init(ks[0], out_planes, in_planes, 3, 3),
         "w2": conv_init(ks[1], out_planes, out_planes, 3, 3)}
    if in_planes != out_planes:
        p["wsc"] = conv_init(ks[2], out_planes, in_planes, 1, 1)
    p["bn1_gamma"] = 1.0 + 0.1 * jax.random.normal(ks[3], (in_planes,), jnp.float32)
    p["bn1_beta"] = 0.1 * jax.random.normal(ks[4], (in_planes,), jnp.float32)
    p["bn1_mean"] = 0.1 * jax.random.normal(ks[5], (in_planes,), jnp.float32)
    p["bn1_var"] = jnp.abs(jax.random.normal(ks[6], (in_planes,), jnp.float32)) + 0.5
    p["bn2_gamma"] = 1.0 + 0.1 * jax.random.normal(ks[7], (out_planes,), jnp.float32)
    p["bn2_beta"] = 0.1 * jax.random.normal(ks[8], (out_planes,), jnp.float32)
    p["bn2_mean"] = 0.1 * jax.random.normal(ks[9], (out_planes,), jnp.float32)
    p["bn2_var"] = jnp.abs(jax.random.normal(ks[10], (out_planes,), jnp.float32)) + 0.5
    return p


# ------------------------------------------------------------------
# BasicBlock forward (dropRate = 0)
# ------------------------------------------------------------------
def basic_block_forward(x_nchw, packed, *, stride, out_planes):
    x = jnp.transpose(x_nchw, (0, 2, 3, 1)).astype(jnp.float32)   # NCHW -> NHWC
    N, H, W, Cin = x.shape
    Npad = packed["w2_taps"].shape[-1]
    equal = "wsc" not in packed

    # BN1 + ReLU once in XLA (M*Cin elements, not 9x per patch).
    a = jnp.maximum(x * packed["s1"] + packed["b1"], 0.0)

    Ho = (H - 1) // stride + 1
    Wo = (W - 1) // stride + 1
    epi = (packed["es"], packed["eb"])

    # ---- stage A: conv1 (3x3, stride) with fused BN2+ReLU epilogue -> bf16.
    if stride == 1:
        Cinp = packed["w1_taps"].shape[1]
        a_p = jnp.pad(a.astype(jnp.bfloat16),
                      ((0, 0), (1, 1), (1, 1), (0, Cinp - Cin)))
        o1 = conv3x3_implicit(a_p, packed["w1_taps"], epilogue=epi,
                              out_dtype=jnp.bfloat16)
    else:
        K1p = packed["w1_mm"].shape[0]
        a_sp = jnp.pad(a.astype(jnp.bfloat16), ((0, 0), (1, 1), (1, 1), (0, 0)))
        p1 = _im2col(a_sp, 3, stride, Ho, Wo, extra_cols=K1p - 9 * Cin)
        o1 = fused_matmul(p1, packed["w1_mm"], epilogue=epi,
                          out_dtype=jnp.bfloat16).reshape(N, Ho, Wo, Npad)

    # ---- stage B: conv2 (3x3, stride 1) + shortcut as one implicit GEMM.
    o1p = jnp.pad(o1, ((0, 0), (1, 1), (1, 1), (0, 0)))   # zero halo (post-ReLU)
    if equal:
        assert stride == 1, "identity shortcut requires stride == 1"
        res = jnp.pad(x, ((0, 0), (0, 0), (0, 0), (0, Npad - Cin)))
        out4 = conv3x3_implicit(o1p, packed["w2_taps"], residual=res,
                                out_dtype=jnp.float32)
    else:
        Cscp = packed["wsc"].shape[0]
        xsc = jnp.pad(a[:, ::stride, ::stride, :],
                      ((0, 0), (0, 0), (0, 0), (0, Cscp - Cin))).astype(jnp.bfloat16)
        out4 = conv3x3_implicit(o1p, packed["w2_taps"],
                                shortcut=(xsc, packed["wsc"]),
                                out_dtype=jnp.float32)

    out = out4[..., :out_planes]
    return jnp.transpose(out, (0, 3, 1, 2))               # NHWC -> NCHW


# ------------------------------------------------------------------
# Reference (lax.conv, same bf16-in / f32-accumulate dtype chain)
# ------------------------------------------------------------------
def reference_forward(x_nchw, params, stride, eps=1e-5):
    x = jnp.transpose(x_nchw, (0, 2, 3, 1)).astype(jnp.float32)
    s1, b1 = bn_affine(params["bn1_gamma"], params["bn1_beta"],
                       params["bn1_mean"], params["bn1_var"], eps)
    s2, b2 = bn_affine(params["bn2_gamma"], params["bn2_beta"],
                       params["bn2_mean"], params["bn2_var"], eps)

    def conv(inp, w, s, pad):
        return lax.conv_general_dilated(
            inp.astype(jnp.bfloat16), w.astype(jnp.bfloat16), (s, s),
            [(pad, pad), (pad, pad)],
            dimension_numbers=("NHWC", "OIHW", "NHWC"),
            preferred_element_type=jnp.float32)

    a = jnp.maximum(x * s1 + b1, 0.0)
    o = conv(a, params["w1"], stride, 1)
    o = jnp.maximum(o * s2 + b2, 0.0)
    o2 = conv(o, params["w2"], 1, 1)
    sc = conv(a, params["wsc"], stride, 0) if "wsc" in params else x
    return jnp.transpose(sc + o2, (0, 3, 1, 2))


# ------------------------------------------------------------------
if __name__ == "__main__":
    key = jax.random.PRNGKey(0)
    N, H, W = 2, 16, 16

    configs = [
        # shortcut path: stride-2 conv1 (im2col matmul) + conv2 with the 1x1
        # strided shortcut folded into one implicit-GEMM kernel
        (4, 8, 2),
        # equalInOut path: both convs as implicit GEMM, identity residual
        (8, 8, 1),
    ]

    for (cin, cout, stride) in configs:
        kx, kp, key = jax.random.split(key, 3)
        x = jax.random.normal(kx, (N, cin, H, W), jnp.float32)
        params = init_params(kp, cin, cout)
        packed = pack_params(params, stride)       # hoisted out of the forward

        fwd = jax.jit(functools.partial(basic_block_forward, stride=stride,
                                        out_planes=cout))
        out = jax.block_until_ready(fwd(x, packed))
        ref = jax.block_until_ready(reference_forward(x, params, stride))

        assert out.shape == (N, cout, H // stride, W // stride), out.shape
        assert jnp.allclose(out, ref, atol=2e-2, rtol=2e-2), \
            float(jnp.max(jnp.abs(out - ref)))

    print("KERNEL_OK")
</pallas_src>

<mosaic_0001>
module attributes {stable_mosaic.version = 11 : i64} {
  func.func @kernel(%arg0: i32, %arg1: i32, %arg2: memref<128x128xbf16, #tpu.memory_space<vmem>>, %arg3: memref<128x128xbf16, #tpu.memory_space<vmem>>, %arg4: memref<1x128xf32, #tpu.memory_space<vmem>>, %arg5: memref<1x128xf32, #tpu.memory_space<vmem>>, %arg6: memref<128x128xbf16, #tpu.memory_space<vmem>>, %arg7: memref<128x128xf32, #tpu.memory_space<vmem>>) attributes {dimension_semantics = [#tpu.dimension_semantics<parallel>, #tpu.dimension_semantics<arbitrary>], iteration_bounds = array<i64: 1, 1>, scalar_prefetch = 0 : i64, scratch_operands = 1 : i64, tpu.core_type = #tpu.core_type<tc>, window_params = [{transform_indices = @transform_0, window_bounds = array<i64: 128, 128>}, {pipeline_mode = #tpu.pipeline_mode<synchronous>, transform_indices = @transform_1, window_bounds = array<i64: 128, 128>}, {pipeline_mode = #tpu.pipeline_mode<synchronous>, transform_indices = @transform_2, window_bounds = array<i64: 1, 128>}, {pipeline_mode = #tpu.pipeline_mode<synchronous>, transform_indices = @transform_3, window_bounds = array<i64: 1, 128>}, {transform_indices = @transform_4, window_bounds = array<i64: 128, 128>}]} {
    %c0_i32 = arith.constant 0 : i32
    %0 = arith.cmpi eq, %arg1, %c0_i32 : i32
    %1 = arith.extui %0 : i1 to i32
    %c0_i32_0 = arith.constant 0 : i32
    %2 = arith.cmpi ne, %1, %c0_i32_0 : i32
    scf.if %2 {
      %cst_9 = arith.constant 0.000000e+00 : f32
      %15 = vector.broadcast %cst_9 : f32 to vector<128x128xf32>
      %c0_10 = arith.constant 0 : index
      %c0_11 = arith.constant 0 : index
      %16 = vector.load %arg7[%c0_10, %c0_11] : memref<128x128xf32, #tpu.memory_space<vmem>>, vector<128x128xf32>
      tpu.vector_store %arg7[%c0_10, %c0_11], %15 {strides = array<i32>} : memref<128x128xf32, #tpu.memory_space<vmem>>, vector<128x128xf32>,
    } else {
    }
    %c128_i32 = arith.constant 128 : i32
    %3 = arith.muli %arg1, %c128_i32 : i32
    %4 = tpu.assume_multiple %3, 128 : i32
    %5 = arith.index_cast %4 : i32 to index
    %c0 = arith.constant 0 : index
    %6 = vector.load %arg3[%5, %c0] : memref<128x128xbf16, #tpu.memory_space<vmem>>, vector<128x128xbf16>
    %c0_1 = arith.constant 0 : index
    %c0_2 = arith.constant 0 : index
    %7 = vector.load %arg7[%c0_1, %c0_2] : memref<128x128xf32, #tpu.memory_space<vmem>>, vector<128x128xf32>
    %c0_3 = arith.constant 0 : index
    %c0_4 = arith.constant 0 : index
    %8 = vector.load %arg2[%c0_3, %c0_4] : memref<128x128xbf16, #tpu.memory_space<vmem>>, vector<128x128xbf16>
    %cst = arith.constant dense<0.000000e+00> : vector<128x128xf32>
    %9 = tpu.matmul %8, %6, %cst {dimension_numbers = #tpu.dot_dimension_numbers<[1], [0], [0], [1], [0, 0, 1, 1], [], []>} : vector<128x128xbf16>, vector<128x128xbf16>, vector<128x128xf32> -> vector<128x128xf32>
    %10 = arith.addf %7, %9 : vector<128x128xf32>
    %c0_5 = arith.constant 0 : index
    %c0_6 = arith.constant 0 : index
    %11 = vector.load %arg7[%c0_5, %c0_6] : memref<128x128xf32, #tpu.memory_space<vmem>>, vector<128x128xf32>
    tpu.vector_store %arg7[%c0_5, %c0_6], %10 {strides = array<i32>} : memref<128x128xf32, #tpu.memory_space<vmem>>, vector<128x128xf32>,
    %c0_i32_7 = arith.constant 0 : i32
    %12 = arith.cmpi eq, %arg1, %c0_i32_7 : i32
    %13 = arith.extui %12 : i1 to i32
    %c0_i32_8 = arith.constant 0 : i32
    %14 = arith.cmpi ne, %13, %c0_i32_8 : i32
    scf.if %14 {
      %c0_9 = arith.constant 0 : index
      %c0_10 = arith.constant 0 : index
      %15 = vector.load %arg7[%c0_9, %c0_10] : memref<128x128xf32, #tpu.memory_space<vmem>>, vector<128x128xf32>
      %c0_11 = arith.constant 0 : index
      %c0_12 = arith.constant 0 : index
      %16 = vector.load %arg4[%c0_11, %c0_12] : memref<1x128xf32, #tpu.memory_space<vmem>>, vector<1x128xf32>
      %17 = vector.broadcast %16 : vector<1x128xf32> to vector<128x128xf32>
      %18 = arith.mulf %15, %17 : vector<128x128xf32>
      %c0_13 = arith.constant 0 : index
      %c0_14 = arith.constant 0 : index
      %19 = vector.load %arg5[%c0_13, %c0_14] : memref<1x128xf32, #tpu.memory_space<vmem>>, vector<1x128xf32>
      %20 = vector.broadcast %19 : vector<1x128xf32> to vector<128x128xf32>
      %21 = arith.addf %18, %20 : vector<128x128xf32>
      %cst_15 = arith.constant 0.000000e+00 : f32
      %22 = vector.broadcast %cst_15 : f32 to vector<128x128xf32>
      %23 = arith.maximumf %21, %22 : vector<128x128xf32>
      %24 = arith.truncf %23 : vector<128x128xf32> to vector<128x128xbf16>
      %c0_16 = arith.constant 0 : index
      %c0_17 = arith.constant 0 : index
      %25 = vector.load %arg6[%c0_16, %c0_17] : memref<128x128xbf16, #tpu.memory_space<vmem>>, vector<128x128xbf16>
      tpu.vector_store %arg6[%c0_16, %c0_17], %24 {strides = array<i32>} : memref<128x128xbf16, #tpu.memory_space<vmem>>, vector<128x128xbf16>,
    } else {
    }
    return
  }
  func.func @transform_0(%arg0: i32, %arg1: i32) -> (i32, i32) {
    %c0_i32 = arith.constant 0 : i32
    return %arg0, %arg1 : i32, i32
  }
  func.func @transform_1(%arg0: i32, %arg1: i32) -> (i32, i32) {
    %c0_i32 = arith.constant 0 : i32
    %c0_i32_0 = arith.constant 0 : i32
    %c0_i32_1 = arith.constant 0 : i32
    return %c0_i32, %c0_i32_0 : i32, i32
  }
  func.func @transform_2(%arg0: i32, %arg1: i32) -> (i32, i32) {
    %c0_i32 = arith.constant 0 : i32
    %c0_i32_0 = arith.constant 0 : i32
    %c0_i32_1 = arith.constant 0 : i32
    return %c0_i32, %c0_i32_0 : i32, i32
  }
  func.func @transform_3(%arg0: i32, %arg1: i32) -> (i32, i32) {
    %c0_i32 = arith.constant 0 : i32
    %c0_i32_0 = arith.constant 0 : i32
    %c0_i32_1 = arith.constant 0 : i32
    return %c0_i32, %c0_i32_0 : i32, i32
  }
  func.func @transform_4(%arg0: i32, %arg1: i32) -> (i32, i32) {
    %c0_i32 = arith.constant 0 : i32
    %c0_i32_0 = arith.constant 0 : i32
    return %arg0, %c0_i32 : i32, i32
  }
}

module attributes {stable_mosaic.version = 11 : i64} {
  func.func @kernel(%arg0: i32, %arg1: memref<1x10x10x128xbf16, #tpu.memory_space<vmem>>, %arg2: memref<9x128x128xbf16, #tpu.memory_space<vmem>>, %arg3: memref<1x8x8x128xbf16, #tpu.memory_space<vmem>>, %arg4: memref<128x128xbf16, #tpu.memory_space<vmem>>, %arg5: memref<1x8x8x128xf32, #tpu.memory_space<vmem>>) attributes {dimension_semantics = [#tpu.dimension_semantics<parallel>], iteration_bounds = array<i64: 2>, scalar_prefetch = 0 : i64, scratch_operands = 0 : i64, tpu.core_type = #tpu.core_type<tc>, window_params = [{transform_indices = @transform_0, window_bounds = array<i64: 1, 10, 10, 128>}, {pipeline_mode = #tpu.pipeline_mode<synchronous>, transform_indices = @transform_1, window_bounds = array<i64: 9, 128, 128>}, {transform_indices = @transform_2, window_bounds = array<i64: 1, 8, 8, 128>}, {pipeline_mode = #tpu.pipeline_mode<synchronous>, transform_indices = @transform_3, window_bounds = array<i64: 128, 128>}, {transform_indices = @transform_4, window_bounds = array<i64: 1, 8, 8, 128>}]} {
    %c0 = arith.constant 0 : index
    %c0_0 = arith.constant 0 : index
    %c0_1 = arith.constant 0 : index
    %c0_2 = arith.constant 0 : index
    %0 = vector.load %arg3[%c0, %c0_0, %c0_1, %c0_2] : memref<1x8x8x128xbf16, #tpu.memory_space<vmem>>, vector<1x8x8x128xbf16>
    %1 = vector.shape_cast %0 : vector<1x8x8x128xbf16> to vector<64x128xbf16>
    %c0_3 = arith.constant 0 : index
    %c0_4 = arith.constant 0 : index
    %2 = vector.load %arg4[%c0_3, %c0_4] : memref<128x128xbf16, #tpu.memory_space<vmem>>, vector<128x128xbf16>
    %cst = arith.constant dense<0.000000e+00> : vector<64x128xf32>
    %3 = tpu.matmul %1, %2, %cst {dimension_numbers = #tpu.dot_dimension_numbers<[1], [0], [0], [1], [0, 0, 1, 1], [], []>} : vector<64x128xbf16>, vector<128x128xbf16>, vector<64x128xf32> -> vector<64x128xf32>
    %c0_5 = arith.constant 0 : index
    %c0_6 = arith.constant 0 : index
    %c0_7 = arith.constant 0 : index
    %c0_8 = arith.constant 0 : index
    %4 = vector.load %arg1[%c0_5, %c0_6, %c0_7, %c0_8] : memref<1x10x10x128xbf16, #tpu.memory_space<vmem>>, vector<1x8x8x128xbf16>
    %5 = vector.shape_cast %4 : vector<1x8x8x128xbf16> to vector<64x128xbf16>
    %c0_9 = arith.constant 0 : index
    %c0_10 = arith.constant 0 : index
    %c0_11 = arith.constant 0 : index
    %6 = vector.load %arg2[%c0_9, %c0_10, %c0_11] : memref<9x128x128xbf16, #tpu.memory_space<vmem>>, vector<1x128x128xbf16>
    %7 = vector.shape_cast %6 : vector<1x128x128xbf16> to vector<128x128xbf16>
    %cst_12 = arith.constant dense<0.000000e+00> : vector<64x128xf32>
    %8 = tpu.matmul %5, %7, %cst_12 {dimension_numbers = #tpu.dot_dimension_numbers<[1], [0], [0], [1], [0, 0, 1, 1], [], []>} : vector<64x128xbf16>, vector<128x128xbf16>, vector<64x128xf32> -> vector<64x128xf32>
    %9 = arith.addf %3, %8 : vector<64x128xf32>
    %c0_13 = arith.constant 0 : index
    %c0_14 = arith.constant 0 : index
    %c1 = arith.constant 1 : index
    %c0_15 = arith.constant 0 : index
    %10 = vector.load %arg1[%c0_13, %c0_14, %c1, %c0_15] : memref<1x10x10x128xbf16, #tpu.memory_space<vmem>>, vector<1x8x8x128xbf16>
    %11 = vector.shape_cast %10 : vector<1x8x8x128xbf16> to vector<64x128xbf16>
    %c1_16 = arith.constant 1 : index
    %c0_17 = arith.constant 0 : index
    %c0_18 = arith.constant 0 : index
    %12 = vector.load %arg2[%c1_16, %c0_17, %c0_18] : memref<9x128x128xbf16, #tpu.memory_space<vmem>>, vector<1x128x128xbf16>
    %13 = vector.shape_cast %12 : vector<1x128x128xbf16> to vector<128x128xbf16>
    %cst_19 = arith.constant dense<0.000000e+00> : vector<64x128xf32>
    %14 = tpu.matmul %11, %13, %cst_19 {dimension_numbers = #tpu.dot_dimension_numbers<[1], [0], [0], [1], [0, 0, 1, 1], [], []>} : vector<64x128xbf16>, vector<128x128xbf16>, vector<64x128xf32> -> vector<64x128xf32>
    %15 = arith.addf %9, %14 : vector<64x128xf32>
    %c0_20 = arith.constant 0 : index
    %c0_21 = arith.constant 0 : index
    %c2 = arith.constant 2 : index
    %c0_22 = arith.constant 0 : index
    %16 = vector.load %arg1[%c0_20, %c0_21, %c2, %c0_22] : memref<1x10x10x128xbf16, #tpu.memory_space<vmem>>, vector<1x8x8x128xbf16>
    %17 = vector.shape_cast %16 : vector<1x8x8x128xbf16> to vector<64x128xbf16>
    %c2_23 = arith.constant 2 : index
    %c0_24 = arith.constant 0 : index
    %c0_25 = arith.constant 0 : index
    %18 = vector.load %arg2[%c2_23, %c0_24, %c0_25] : memref<9x128x128xbf16, #tpu.memory_space<vmem>>, vector<1x128x128xbf16>
    %19 = vector.shape_cast %18 : vector<1x128x128xbf16> to vector<128x128xbf16>
    %cst_26 = arith.constant dense<0.000000e+00> : vector<64x128xf32>
    %20 = tpu.matmul %17, %19, %cst_26 {dimension_numbers = #tpu.dot_dimension_numbers<[1], [0], [0], [1], [0, 0, 1, 1], [], []>} : vector<64x128xbf16>, vector<128x128xbf16>, vector<64x128xf32> -> vector<64x128xf32>
    %21 = arith.addf %15, %20 : vector<64x128xf32>
    %c0_27 = arith.constant 0 : index
    %c1_28 = arith.constant 1 : index
    %c0_29 = arith.constant 0 : index
    %c0_30 = arith.constant 0 : index
    %22 = vector.load %arg1[%c0_27, %c1_28, %c0_29, %c0_30] : memref<1x10x10x128xbf16, #tpu.memory_space<vmem>>, vector<1x8x8x128xbf16>
    %23 = vector.shape_cast %22 : vector<1x8x8x128xbf16> to vector<64x128xbf16>
    %c3 = arith.constant 3 : index
    %c0_31 = arith.constant 0 : index
    %c0_32 = arith.constant 0 : index
    %24 = vector.load %arg2[%c3, %c0_31, %c0_32] : memref<9x128x128xbf16, #tpu.memory_space<vmem>>, vector<1x128x128xbf16>
    %25 = vector.shape_cast %24 : vector<1x128x128xbf16> to vector<128x128xbf16>
    %cst_33 = arith.constant dense<0.000000e+00> : vector<64x128xf32>
    %26 = tpu.matmul %23, %25, %cst_33 {dimension_numbers = #tpu.dot_dimension_numbers<[1], [0], [0], [1], [0, 0, 1, 1], [], []>} : vector<64x128xbf16>, vector<128x128xbf16>, vector<64x128xf32> -> vector<64x128xf32>
    %27 = arith.addf %21, %26 : vector<64x128xf32>
    %c0_34 = arith.constant 0 : index
    %c1_35 = arith.constant 1 : index
    %c1_36 = arith.constant 1 : index
    %c0_37 = arith.constant 0 : index
    %28 = vector.load %arg1[%c0_34, %c1_35, %c1_36, %c0_37] : memref<1x10x10x128xbf16, #tpu.memory_space<vmem>>, vector<1x8x8x128xbf16>
    %29 = vector.shape_cast %28 : vector<1x8x8x128xbf16> to vector<64x128xbf16>
    %c4 = arith.constant 4 : index
    %c0_38 = arith.constant 0 : index
    %c0_39 = arith.constant 0 : index
    %30 = vector.load %arg2[%c4, %c0_38, %c0_39] : memref<9x128x128xbf16, #tpu.memory_space<vmem>>, vector<1x128x128xbf16>
    %31 = vector.shape_cast %30 : vector<1x128x128xbf16> to vector<128x128xbf16>
    %cst_40 = arith.constant dense<0.000000e+00> : vector<64x128xf32>
    %32 = tpu.matmul %29, %31, %cst_40 {dimension_numbers = #tpu.dot_dimension_numbers<[1], [0], [0], [1], [0, 0, 1, 1], [], []>} : vector<64x128xbf16>, vector<128x128xbf16>, vector<64x128xf32> -> vector<64x128xf32>
    %33 = arith.addf %27, %32 : vector<64x128xf32>
    %c0_41 = arith.constant 0 : index
    %c1_42 = arith.constant 1 : index
    %c2_43 = arith.constant 2 : index
    %c0_44 = arith.constant 0 : index
    %34 = vector.load %arg1[%c0_41, %c1_42, %c2_43, %c0_44] : memref<1x10x10x128xbf16, #tpu.memory_space<vmem>>, vector<1x8x8x128xbf16>
    %35 = vector.shape_cast %34 : vector<1x8x8x128xbf16> to vector<64x128xbf16>
    %c5 = arith.constant 5 : index
    %c0_45 = arith.constant 0 : index
    %c0_46 = arith.constant 0 : index
    %36 = vector.load %arg2[%c5, %c0_45, %c0_46] : memref<9x128x128xbf16, #tpu.memory_space<vmem>>, vector<1x128x128xbf16>
    %37 = vector.shape_cast %36 : vector<1x128x128xbf16> to vector<128x128xbf16>
    %cst_47 = arith.constant dense<0.000000e+00> : vector<64x128xf32>
    %38 = tpu.matmul %35, %37, %cst_47 {dimension_numbers = #tpu.dot_dimension_numbers<[1], [0], [0], [1], [0, 0, 1, 1], [], []>} : vector<64x128xbf16>, vector<128x128xbf16>, vector<64x128xf32> -> vector<64x128xf32>
    %39 = arith.addf %33, %38 : vector<64x128xf32>
    %c0_48 = arith.constant 0 : index
    %c2_49 = arith.constant 2 : index
    %c0_50 = arith.constant 0 : index
    %c0_51 = arith.constant 0 : index
    %40 = vector.load %arg1[%c0_48, %c2_49, %c0_50, %c0_51] : memref<1x10x10x128xbf16, #tpu.memory_space<vmem>>, vector<1x8x8x128xbf16>
    %41 = vector.shape_cast %40 : vector<1x8x8x128xbf16> to vector<64x128xbf16>
    %c6 = arith.constant 6 : index
    %c0_52 = arith.constant 0 : index
    %c0_53 = arith.constant 0 : index
    %42 = vector.load %arg2[%c6, %c0_52, %c0_53] : memref<9x128x128xbf16, #tpu.memory_space<vmem>>, vector<1x128x128xbf16>
    %43 = vector.shape_cast %42 : vector<1x128x128xbf16> to vector<128x128xbf16>
    %cst_54 = arith.constant dense<0.000000e+00> : vector<64x128xf32>
    %44 = tpu.matmul %41, %43, %cst_54 {dimension_numbers = #tpu.dot_dimension_numbers<[1], [0], [0], [1], [0, 0, 1, 1], [], []>} : vector<64x128xbf16>, vector<128x128xbf16>, vector<64x128xf32> -> vector<64x128xf32>
    %45 = arith.addf %39, %44 : vector<64x128xf32>
    %c0_55 = arith.constant 0 : index
    %c2_56 = arith.constant 2 : index
    %c1_57 = arith.constant 1 : index
    %c0_58 = arith.constant 0 : index
    %46 = vector.load %arg1[%c0_55, %c2_56, %c1_57, %c0_58] : memref<1x10x10x128xbf16, #tpu.memory_space<vmem>>, vector<1x8x8x128xbf16>
    %47 = vector.shape_cast %46 : vector<1x8x8x128xbf16> to vector<64x128xbf16>
    %c7 = arith.constant 7 : index
    %c0_59 = arith.constant 0 : index
    %c0_60 = arith.constant 0 : index
    %48 = vector.load %arg2[%c7, %c0_59, %c0_60] : memref<9x128x128xbf16, #tpu.memory_space<vmem>>, vector<1x128x128xbf16>
    %49 = vector.shape_cast %48 : vector<1x128x128xbf16> to vector<128x128xbf16>
    %cst_61 = arith.constant dense<0.000000e+00> : vector<64x128xf32>
    %50 = tpu.matmul %47, %49, %cst_61 {dimension_numbers = #tpu.dot_dimension_numbers<[1], [0], [0], [1], [0, 0, 1, 1], [], []>} : vector<64x128xbf16>, vector<128x128xbf16>, vector<64x128xf32> -> vector<64x128xf32>
    %51 = arith.addf %45, %50 : vector<64x128xf32>
    %c0_62 = arith.constant 0 : index
    %c2_63 = arith.constant 2 : index
    %c2_64 = arith.constant 2 : index
    %c0_65 = arith.constant 0 : index
    %52 = vector.load %arg1[%c0_62, %c2_63, %c2_64, %c0_65] : memref<1x10x10x128xbf16, #tpu.memory_space<vmem>>, vector<1x8x8x128xbf16>
    %53 = vector.shape_cast %52 : vector<1x8x8x128xbf16> to vector<64x128xbf16>
    %c8 = arith.constant 8 : index
    %c0_66 = arith.constant 0 : index
    %c0_67 = arith.constant 0 : index
    %54 = vector.load %arg2[%c8, %c0_66, %c0_67] : memref<9x128x128xbf16, #tpu.memory_space<vmem>>, vector<1x128x128xbf16>
    %55 = vector.shape_cast %54 : vector<1x128x128xbf16> to vector<128x128xbf16>
    %cst_68 = arith.constant dense<0.000000e+00> : vector<64x128xf32>
    %56 = tpu.matmul %53, %55, %cst_68 {dimension_numbers = #tpu.dot_dimension_numbers<[1], [0], [0], [1], [0, 0, 1, 1], [], []>} : vector<64x128xbf16>, vector<128x128xbf16>, vector<64x128xf32> -> vector<64x128xf32>
    %57 = arith.addf %51, %56 : vector<64x128xf32>
    %58 = vector.shape_cast %57 : vector<64x128xf32> to vector<1x8x8x128xf32>
    %c0_69 = arith.constant 0 : index
    %c0_70 = arith.constant 0 : index
    %c0_71 = arith.constant 0 : index
    %c0_72 = arith.constant 0 : index
    %59 = vector.load %arg5[%c0_69, %c0_70, %c0_71, %c0_72] : memref<1x8x8x128xf32, #tpu.memory_space<vmem>>, vector<1x8x8x128xf32>
    tpu.vector_store %arg5[%c0_69, %c0_70, %c0_71, %c0_72], %58 {strides = array<i32>} : memref<1x8x8x128xf32, #tpu.memory_space<vmem>>, vector<1x8x8x128xf32>,
    return
  }
  func.func @transform_0(%arg0: i32) -> (i32, i32, i32, i32) {
    %c0_i32 = arith.constant 0 : i32
    %c0_i32_0 = arith.constant 0 : i32
    %c0_i32_1 = arith.constant 0 : i32
    %c0_i32_2 = arith.constant 0 : i32
    return %arg0, %c0_i32, %c0_i32_0, %c0_i32_1 : i32, i32, i32, i32
  }
  func.func @transform_1(%arg0: i32) -> (i32, i32, i32) {
    %c0_i32 = arith.constant 0 : i32
    %c0_i32_0 = arith.constant 0 : i32
    %c0_i32_1 = arith.constant 0 : i32
    %c0_i32_2 = arith.constant 0 : i32
    return %c0_i32, %c0_i32_0, %c0_i32_1 : i32, i32, i32
  }
  func.func @transform_2(%arg0: i32) -> (i32, i32, i32, i32) {
    %c0_i32 = arith.constant 0 : i32
    %c0_i32_0 = arith.constant 0 : i32
    %c0_i32_1 = arith.constant 0 : i32
    %c0_i32_2 = arith.constant 0 : i32
    return %arg0, %c0_i32, %c0_i32_0, %c0_i32_1 : i32, i32, i32, i32
  }
  func.func @transform_3(%arg0: i32) -> (i32, i32) {
    %c0_i32 = arith.constant 0 : i32
    %c0_i32_0 = arith.constant 0 : i32
    %c0_i32_1 = arith.constant 0 : i32
    return %c0_i32, %c0_i32_0 : i32, i32
  }
  func.func @transform_4(%arg0: i32) -> (i32, i32, i32, i32) {
    %c0_i32 = arith.constant 0 : i32
    %c0_i32_0 = arith.constant 0 : i32
    %c0_i32_1 = arith.constant 0 : i32
    %c0_i32_2 = arith.constant 0 : i32
    return %arg0, %c0_i32, %c0_i32_0, %c0_i32_1 : i32, i32, i32, i32
  }
}

</mosaic_0001>

<llo_original>
// kernel: basic_block_forward.2
$region0: #{basic_block_forward.2}
  #allocation0 [shape = 'u32[]', space=smem, size = 0x4, offset = 0x4, fixed_abs, tag = 'smem constant byte address 0x4 - core index']
  #allocation1 [shape = 'u32[72,128]{1,0:T(1,128)}', space=vmem, size = 0x9000, scoped, tag = 'internal scratch']
  #allocation2 [shape = 'f32[128,128]{1,0:T(8,128)}', space=vmem, size = 0x10000, scoped, tag = 'scratch operand']
  %s0 = inlined_call_operand.vmem [shape: bf16[128,128], index: 0, kind: input, shape index: {}]
  %s1 = inlined_call_operand.vmem [shape: bf16[128,128], index: 1, kind: input, shape index: {}]
  %s2 = inlined_call_operand.vmem [shape: f32[1,128], index: 2, kind: input, shape index: {}]
  %s3 = inlined_call_operand.vmem [shape: f32[1,128], index: 3, kind: input, shape index: {}]
  %s4 = inlined_call_operand.vmem [shape: bf16[128,128], index: 4, kind: output, shape index: {}]
  %s5 = sld [smem:[#allocation0]]
  $region34: #{basic_block_forward.2} parent=0
    _
  %s7 = ssub.s32 1, %s5
  %s8 = scalar_select 0, %s7, %s5
  // Predicated region
  $region2: #{basic_block_forward.2} parent=0 // pred_check
    _
  $region3: #{basic_block_forward.2} parent=0 // pred_check_branch
    %10 = sbr.rel (0) target = $region5
  $region4: #{basic_block_forward.2} parent=0 // pred_region
    _
  $region5: #{basic_block_forward.2} parent=0 // pred_fallthru
    _
  // Predicated region
  $region6: #{basic_block_forward.2} parent=0 // pred_check
    _
  $region7: #{basic_block_forward.2} parent=0 // pred_check_branch
    %12 = sbr.rel (0) target = $region9
  $region8: #{basic_block_forward.2} parent=0 // pred_region
    _
  $region9: #{basic_block_forward.2} parent=0 // pred_fallthru
    _
  // Predicated region
  $region10: #{basic_block_forward.2} parent=0 // pred_check
    _
  $region11: #{basic_block_forward.2} parent=0 // pred_check_branch
    %14 = sbr.rel (0) target = $region13
  $region12: #{basic_block_forward.2} parent=0 // pred_region
    _
  $region13: #{basic_block_forward.2} parent=0 // pred_fallthru
    _
  // Predicated region
  $region14: #{basic_block_forward.2} parent=0 // pred_check
    _
  $region15: #{basic_block_forward.2} parent=0 // pred_check_branch
    %16 = sbr.rel (0) target = $region17
  $region16: #{basic_block_forward.2} parent=0 // pred_region
    _
  $region17: #{basic_block_forward.2} parent=0 // pred_fallthru
    _
  %p17 = scmp.eq.s32.totalorder 0, 0
  // Predicated region
  $region18: #{basic_block_forward.2} parent=0 // pred_check
    %p18 = pneg %p17
  $region19: #{basic_block_forward.2} parent=0 // pred_check_branch
    %20 = sbr.rel (%p18) target = $region21
  $region20: #{basic_block_forward.2} parent=0 // pred_region
    %21 = vst [vmem:[#allocation2] sm:$0xff] 0.0
    %22 = vst [vmem:[#allocation2 + $0x8] sm:$0xff] 0.0
    %23 = vst [vmem:[#allocation2 + $0x10] sm:$0xff] 0.0
    %24 = vst [vmem:[#allocation2 + $0x18] sm:$0xff] 0.0
    %25 = vst [vmem:[#allocation2 + $0x20] sm:$0xff] 0.0
    %26 = vst [vmem:[#allocation2 + $0x28] sm:$0xff] 0.0
    %27 = vst [vmem:[#allocation2 + $0x30] sm:$0xff] 0.0
    %28 = vst [vmem:[#allocation2 + $0x38] sm:$0xff] 0.0
    %29 = vst [vmem:[#allocation2 + $0x40] sm:$0xff] 0.0
    %30 = vst [vmem:[#allocation2 + $0x48] sm:$0xff] 0.0
    %31 = vst [vmem:[#allocation2 + $0x50] sm:$0xff] 0.0
    %32 = vst [vmem:[#allocation2 + $0x58] sm:$0xff] 0.0
    %33 = vst [vmem:[#allocation2 + $0x60] sm:$0xff] 0.0
    %34 = vst [vmem:[#allocation2 + $0x68] sm:$0xff] 0.0
    %35 = vst [vmem:[#allocation2 + $0x70] sm:$0xff] 0.0
    %36 = vst [vmem:[#allocation2 + $0x78] sm:$0xff] 0.0
  $region21: #{basic_block_forward.2} parent=0 // pred_fallthru
    _
  %s37 = smul.u32 0, 128
  %s38 = sshra.s32 %s37, 3
  %s39 = sand.u32 %s37, 7
  %s40 = smul.addr %s38, 4
  %s41 = scalar_lea.vmem %s1, %s40
  %v42 = vld [vmem:[%s41] sm:$0xf]
  %v43 = vld [vmem:[%s41 + $0x4] sm:$0xf]
  %v44 = vld [vmem:[%s41 + $0x8] sm:$0xf]
  %v45 = vld [vmem:[%s41 + $0xc] sm:$0xf]
  %v46 = vld [vmem:[%s41 + $0x10] sm:$0xf]
  %v47 = vld [vmem:[%s41 + $0x14] sm:$0xf]
  %v48 = vld [vmem:[%s41 + $0x18] sm:$0xf]
  %v49 = vld [vmem:[%s41 + $0x1c] sm:$0xf]
  %v50 = vld [vmem:[%s41 + $0x20] sm:$0xf]
  %v51 = vld [vmem:[%s41 + $0x24] sm:$0xf]
  %v52 = vld [vmem:[%s41 + $0x28] sm:$0xf]
  %v53 = vld [vmem:[%s41 + $0x2c] sm:$0xf]
  %v54 = vld [vmem:[%s41 + $0x30] sm:$0xf]
  %v55 = vld [vmem:[%s41 + $0x34] sm:$0xf]
  %v56 = vld [vmem:[%s41 + $0x38] sm:$0xf]
  %v57 = vld [vmem:[%s41 + $0x3c] sm:$0xf]
  %v58 = vld [vmem:[#allocation2] sm:$0xff]
  %v59 = vld [vmem:[#allocation2 + $0x8] sm:$0xff]
  %v60 = vld [vmem:[#allocation2 + $0x10] sm:$0xff]
  %v61 = vld [vmem:[#allocation2 + $0x18] sm:$0xff]
  %v62 = vld [vmem:[#allocation2 + $0x20] sm:$0xff]
  %v63 = vld [vmem:[#allocation2 + $0x28] sm:$0xff]
  %v64 = vld [vmem:[#allocation2 + $0x30] sm:$0xff]
  %v65 = vld [vmem:[#allocation2 + $0x38] sm:$0xff]
  %v66 = vld [vmem:[#allocation2 + $0x40] sm:$0xff]
  %v67 = vld [vmem:[#allocation2 + $0x48] sm:$0xff]
  %v68 = vld [vmem:[#allocation2 + $0x50] sm:$0xff]
  %v69 = vld [vmem:[#allocation2 + $0x58] sm:$0xff]
  %v70 = vld [vmem:[#allocation2 + $0x60] sm:$0xff]
  %v71 = vld [vmem:[#allocation2 + $0x68] sm:$0xff]
  %v72 = vld [vmem:[#allocation2 + $0x70] sm:$0xff]
  %v73 = vld [vmem:[#allocation2 + $0x78] sm:$0xff]
  %v74 = vld [vmem:[%s0] sm:$0xf]
  %v75 = vld [vmem:[%s0 + $0x4] sm:$0xf]
  %v76 = vld [vmem:[%s0 + $0x8] sm:$0xf]
  %v77 = vld [vmem:[%s0 + $0xc] sm:$0xf]
  %v78 = vld [vmem:[%s0 + $0x10] sm:$0xf]
  %v79 = vld [vmem:[%s0 + $0x14] sm:$0xf]
  %v80 = vld [vmem:[%s0 + $0x18] sm:$0xf]
  %v81 = vld [vmem:[%s0 + $0x1c] sm:$0xf]
  %v82 = vld [vmem:[%s0 + $0x20] sm:$0xf]
  %v83 = vld [vmem:[%s0 + $0x24] sm:$0xf]
  %v84 = vld [vmem:[%s0 + $0x28] sm:$0xf]
  %v85 = vld [vmem:[%s0 + $0x2c] sm:$0xf]
  %v86 = vld [vmem:[%s0 + $0x30] sm:$0xf]
  %v87 = vld [vmem:[%s0 + $0x34] sm:$0xf]
  %v88 = vld [vmem:[%s0 + $0x38] sm:$0xf]
  %v89 = vld [vmem:[%s0 + $0x3c] sm:$0xf]
  %v106 = vunpack.c.l.b16 %v74
  %v107 = vunpack.c.l.b16 %v75
  %v108 = vunpack.c.l.b16 %v76
  %v109 = vunpack.c.l.b16 %v77
  %v110 = vunpack.c.l.b16 %v78
  %v111 = vunpack.c.l.b16 %v79
  %v112 = vunpack.c.l.b16 %v80
  %v113 = vunpack.c.l.b16 %v81
  %v114 = vunpack.c.l.b16 %v82
  %v115 = vunpack.c.l.b16 %v83
  %v116 = vunpack.c.l.b16 %v84
  %v117 = vunpack.c.l.b16 %v85
  %v118 = vunpack.c.l.b16 %v86
  %v119 = vunpack.c.l.b16 %v87
  %v120 = vunpack.c.l.b16 %v88
  %v121 = vunpack.c.l.b16 %v89
  %v122 = vpack.c.b16 %v107, %v106
  %v123 = vpack.c.b16 %v109, %v108
  %v124 = vpack.c.b16 %v111, %v110
  %v125 = vpack.c.b16 %v113, %v112
  %v126 = vpack.c.b16 %v115, %v114
  %v127 = vpack.c.b16 %v117, %v116
  %v128 = vpack.c.b16 %v119, %v118
  %v129 = vpack.c.b16 %v121, %v120
  %v154 = vunpack.c.l.b16 %v42
  %v155 = vunpack.c.l.b16 %v43
  %v156 = vunpack.c.l.b16 %v44
  %v157 = vunpack.c.l.b16 %v45
  %v158 = vunpack.c.l.b16 %v46
  %v159 = vunpack.c.l.b16 %v47
  %v160 = vunpack.c.l.b16 %v48
  %v161 = vunpack.c.l.b16 %v49
  %v162 = vunpack.c.l.b16 %v50
  %v163 = vunpack.c.l.b16 %v51
  %v164 = vunpack.c.l.b16 %v52
  %v165 = vunpack.c.l.b16 %v53
  %v166 = vunpack.c.l.b16 %v54
  %v167 = vunpack.c.l.b16 %v55
  %v168 = vunpack.c.l.b16 %v56
  %v169 = vunpack.c.l.b16 %v57
  %v170 = vpack.c.b16 %v155, %v154
  %v171 = vpack.c.b16 %v157, %v156
  %v172 = vpack.c.b16 %v159, %v158
  %v173 = vpack.c.b16 %v161, %v160
  %v174 = vpack.c.b16 %v163, %v162
  %v175 = vpack.c.b16 %v165, %v164
  %v176 = vpack.c.b16 %v167, %v166
  %v177 = vpack.c.b16 %v169, %v168
  %186 = vmatpush.bf16.msra.mxu0 %v177
  %187 = vmatpush.bf16.msra.mxu0 %v176
  %188 = vmatpush.bf16.msra.mxu0 %v175
  %189 = vmatpush.bf16.msra.mxu0 %v174
  %190 = vmatpush.bf16.msra.mxu0 %v173
  %191 = vmatpush.bf16.msra.mxu0 %v172
  %192 = vmatpush.bf16.msra.mxu0 %v171
  %193 = vmatpush.bf16.msra.mxu0 %v170
  %194 = vmatmul.bf16.gmra.mxu0 %v122
  %v195 = vpop.f32.mrf.mxu0
  %v196 = vadd.f32 0.0, %v195
  %v197 = vpop.f32.mrf.mxu0
  %v198 = vadd.f32 0.0, %v197
  %199 = vmatmul.bf16.gmra.mxu0 %v123
  %v200 = vpop.f32.mrf.mxu0
  %v201 = vadd.f32 0.0, %v200
  %v202 = vpop.f32.mrf.mxu0
  %v203 = vadd.f32 0.0, %v202
  %204 = vmatmul.bf16.gmra.mxu0 %v124
  %v205 = vpop.f32.mrf.mxu0
  %v206 = vadd.f32 0.0, %v205
  %v207 = vpop.f32.mrf.mxu0
  %v208 = vadd.f32 0.0, %v207
  %209 = vmatmul.bf16.gmra.mxu0 %v125
  %v210 = vpop.f32.mrf.mxu0
  %v211 = vadd.f32 0.0, %v210
  %v212 = vpop.f32.mrf.mxu0
  %v213 = vadd.f32 0.0, %v212
  %214 = vmatmul.bf16.gmra.mxu0 %v126
  %v215 = vpop.f32.mrf.mxu0
  %v216 = vadd.f32 0.0, %v215
  %v217 = vpop.f32.mrf.mxu0
  %v218 = vadd.f32 0.0, %v217
  %219 = vmatmul.bf16.gmra.mxu0 %v127
  %v220 = vpop.f32.mrf.mxu0
  %v221 = vadd.f32 0.0, %v220
  %v222 = vpop.f32.mrf.mxu0
  %v223 = vadd.f32 0.0, %v222
  %224 = vmatmul.bf16.gmra.mxu0 %v128
  %v225 = vpop.f32.mrf.mxu0
  %v226 = vadd.f32 0.0, %v225
  %v227 = vpop.f32.mrf.mxu0
  %v228 = vadd.f32 0.0, %v227
  %229 = vmatmul.bf16.gmra.mxu0 %v129
  %v230 = vpop.f32.mrf.mxu0
  %v231 = vadd.f32 0.0, %v230
  %v232 = vpop.f32.mrf.mxu0
  %v233 = vadd.f32 0.0, %v232
  %234 = vdwg.mxu0
  %v235 = vadd.f32 %v58, %v196
  %v236 = vadd.f32 %v59, %v198
  %v237 = vadd.f32 %v60, %v201
  %v238 = vadd.f32 %v61, %v203
  %v239 = vadd.f32 %v62, %v206
  %v240 = vadd.f32 %v63, %v208
  %v241 = vadd.f32 %v64, %v211
  %v242 = vadd.f32 %v65, %v213
  %v243 = vadd.f32 %v66, %v216
  %v244 = vadd.f32 %v67, %v218
  %v245 = vadd.f32 %v68, %v221
  %v246 = vadd.f32 %v69, %v223
  %v247 = vadd.f32 %v70, %v226
  %v248 = vadd.f32 %v71, %v228
  %v249 = vadd.f32 %v72, %v231
  %v250 = vadd.f32 %v73, %v233
  %251 = vst [vmem:[#allocation2] sm:$0xff] %v235
  %252 = vst [vmem:[#allocation2 + $0x8] sm:$0xff] %v236
  %253 = vst [vmem:[#allocation2 + $0x10] sm:$0xff] %v237
  %254 = vst [vmem:[#allocation2 + $0x18] sm:$0xff] %v238
  %255 = vst [vmem:[#allocation2 + $0x20] sm:$0xff] %v239
  %256 = vst [vmem:[#allocation2 + $0x28] sm:$0xff] %v240
  %257 = vst [vmem:[#allocation2 + $0x30] sm:$0xff] %v241
  %258 = vst [vmem:[#allocation2 + $0x38] sm:$0xff] %v242
  %259 = vst [vmem:[#allocation2 + $0x40] sm:$0xff] %v243
  %260 = vst [vmem:[#allocation2 + $0x48] sm:$0xff] %v244
  %261 = vst [vmem:[#allocation2 + $0x50] sm:$0xff] %v245
  %262 = vst [vmem:[#allocation2 + $0x58] sm:$0xff] %v246
  %263 = vst [vmem:[#allocation2 + $0x60] sm:$0xff] %v247
  %264 = vst [vmem:[#allocation2 + $0x68] sm:$0xff] %v248
  %265 = vst [vmem:[#allocation2 + $0x70] sm:$0xff] %v249
  %266 = vst [vmem:[#allocation2 + $0x78] sm:$0xff] %v250
  // Predicated region
  $region22: #{basic_block_forward.2} parent=0 // pred_check
    %p267 = pneg %p17
  $region23: #{basic_block_forward.2} parent=0 // pred_check_branch
    %269 = sbr.rel (%p267) target = $region25
  $region24: #{basic_block_forward.2} parent=0 // pred_region
    %v270 = vld [vmem:[#allocation2] sm:$0xff]
    %v271 = vld [vmem:[#allocation2 + $0x8] sm:$0xff]
    %v272 = vld [vmem:[#allocation2 + $0x10] sm:$0xff]
    %v273 = vld [vmem:[#allocation2 + $0x18] sm:$0xff]
    %v274 = vld [vmem:[#allocation2 + $0x20] sm:$0xff]
    %v275 = vld [vmem:[#allocation2 + $0x28] sm:$0xff]
    %v276 = vld [vmem:[#allocation2 + $0x30] sm:$0xff]
    %v277 = vld [vmem:[#allocation2 + $0x38] sm:$0xff]
    %v278 = vld [vmem:[#allocation2 + $0x40] sm:$0xff]
    %v279 = vld [vmem:[#allocation2 + $0x48] sm:$0xff]
    %v280 = vld [vmem:[#allocation2 + $0x50] sm:$0xff]
    %v281 = vld [vmem:[#allocation2 + $0x58] sm:$0xff]
    %v282 = vld [vmem:[#allocation2 + $0x60] sm:$0xff]
    %v283 = vld [vmem:[#allocation2 + $0x68] sm:$0xff]
    %v284 = vld [vmem:[#allocation2 + $0x70] sm:$0xff]
    %v285 = vld [vmem:[#allocation2 + $0x78] sm:$0xff]
    %v286 = vld [vmem:[%s2] sm:$0x1]
    %v288 = vperm.slane %v286, 0
    %v290 = vmul.f32 %v270, %v288
    %v291 = vmul.f32 %v271, %v288
    %v292 = vmul.f32 %v272, %v288
    %v293 = vmul.f32 %v273, %v288
    %v294 = vmul.f32 %v274, %v288
    %v295 = vmul.f32 %v275, %v288
    %v296 = vmul.f32 %v276, %v288
    %v297 = vmul.f32 %v277, %v288
    %v298 = vmul.f32 %v278, %v288
    %v299 = vmul.f32 %v279, %v288
    %v300 = vmul.f32 %v280, %v288
    %v301 = vmul.f32 %v281, %v288
    %v302 = vmul.f32 %v282, %v288
    %v303 = vmul.f32 %v283, %v288
    %v304 = vmul.f32 %v284, %v288
    %v305 = vmul.f32 %v285, %v288
    %v306 = vld [vmem:[%s3] sm:$0x1]
    %v308 = vperm.slane %v306, 0
    %v310 = vadd.f32 %v290, %v308
    %v311 = vadd.f32 %v291, %v308
    %v312 = vadd.f32 %v292, %v308
    %v313 = vadd.f32 %v293, %v308
    %v314 = vadd.f32 %v294, %v308
    %v315 = vadd.f32 %v295, %v308
    %v316 = vadd.f32 %v296, %v308
    %v317 = vadd.f32 %v297, %v308
    %v318 = vadd.f32 %v298, %v308
    %v319 = vadd.f32 %v299, %v308
    %v320 = vadd.f32 %v300, %v308
    %v321 = vadd.f32 %v301, %v308
    %v322 = vadd.f32 %v302, %v308
    %v323 = vadd.f32 %v303, %v308
    %v324 = vadd.f32 %v304, %v308
    %v325 = vadd.f32 %v305, %v308
    %v326 = vmax.f32 %v310, 0.0
    %v327 = vmax.f32 %v311, 0.0
    %v328 = vmax.f32 %v312, 0.0
    %v329 = vmax.f32 %v313, 0.0
    %v330 = vmax.f32 %v314, 0.0
    %v331 = vmax.f32 %v315, 0.0
    %v332 = vmax.f32 %v316, 0.0
    %v333 = vmax.f32 %v317, 0.0
    %v334 = vmax.f32 %v318, 0.0
    %v335 = vmax.f32 %v319, 0.0
    %v336 = vmax.f32 %v320, 0.0
    %v337 = vmax.f32 %v321, 0.0
    %v338 = vmax.f32 %v322, 0.0
    %v339 = vmax.f32 %v323, 0.0
    %v340 = vmax.f32 %v324, 0.0
    %v341 = vmax.f32 %v325, 0.0
    %v342 = vpack.c.bf16 %v326, %v326
    %v343 = vpack.c.bf16 %v327, %v327
    %v344 = vpack.c.bf16 %v328, %v328
    %v345 = vpack.c.bf16 %v329, %v329
    %v346 = vpack.c.bf16 %v330, %v330
    %v347 = vpack.c.bf16 %v331, %v331
    %v348 = vpack.c.bf16 %v332, %v332
    %v349 = vpack.c.bf16 %v333, %v333
    %v350 = vpack.c.bf16 %v334, %v334
    %v351 = vpack.c.bf16 %v335, %v335
    %v352 = vpack.c.bf16 %v336, %v336
    %v353 = vpack.c.bf16 %v337, %v337
    %v354 = vpack.c.bf16 %v338, %v338
    %v355 = vpack.c.bf16 %v339, %v339
    %v356 = vpack.c.bf16 %v340, %v340
    %v357 = vpack.c.bf16 %v341, %v341
    %358 = vst [vmem:[%s4] sm:$0xf] %v342
    %359 = vst [vmem:[%s4 + $0x4] sm:$0xf] %v343
    %360 = vst [vmem:[%s4 + $0x8] sm:$0xf] %v344
    %361 = vst [vmem:[%s4 + $0xc] sm:$0xf] %v345
    %362 = vst [vmem:[%s4 + $0x10] sm:$0xf] %v346
    %363 = vst [vmem:[%s4 + $0x14] sm:$0xf] %v347
    %364 = vst [vmem:[%s4 + $0x18] sm:$0xf] %v348
    %365 = vst [vmem:[%s4 + $0x1c] sm:$0xf] %v349
    %366 = vst [vmem:[%s4 + $0x20] sm:$0xf] %v350
    %367 = vst [vmem:[%s4 + $0x24] sm:$0xf] %v351
    %368 = vst [vmem:[%s4 + $0x28] sm:$0xf] %v352
    %369 = vst [vmem:[%s4 + $0x2c] sm:$0xf] %v353
    %370 = vst [vmem:[%s4 + $0x30] sm:$0xf] %v354
    %371 = vst [vmem:[%s4 + $0x34] sm:$0xf] %v355
    %372 = vst [vmem:[%s4 + $0x38] sm:$0xf] %v356
    %373 = vst [vmem:[%s4 + $0x3c] sm:$0xf] %v357
  $region25: #{basic_block_forward.2} parent=0 // pred_fallthru
    _
  // Predicated region
  $region26: #{basic_block_forward.2} parent=0 // pred_check
    _
  $region27: #{basic_block_forward.2} parent=0 // pred_check_branch
    %375 = sbr.rel (0) target = $region29
  $region28: #{basic_block_forward.2} parent=0 // pred_region
    _
  $region29: #{basic_block_forward.2} parent=0 // pred_fallthru
    _
  // Predicated region
  $region30: #{basic_block_forward.2} parent=0 // pred_check
    _
  $region31: #{basic_block_forward.2} parent=0 // pred_check_branch
    %377 = sbr.rel (0) target = $region33
  $region32: #{basic_block_forward.2} parent=0 // pred_region
    _
  $region33: #{basic_block_forward.2} parent=0 // pred_fallthru
    _

// kernel: basic_block_forward.3
$region0: #{basic_block_forward.3}
  #allocation0 [shape = 'u32[]', space=smem, size = 0x4, offset = 0x4, fixed_abs, tag = 'smem constant byte address 0x4 - core index']
  #allocation1 [shape = 'u32[72,128]{1,0:T(1,128)}', space=vmem, size = 0x9000, scoped, tag = 'internal scratch']
  %s0 = inlined_call_operand.vmem [shape: bf16[2,10,10,128], index: 0, kind: input, shape index: {}]
  %s1 = inlined_call_operand.vmem [shape: bf16[9,128,128], index: 1, kind: input, shape index: {}]
  %s2 = inlined_call_operand.vmem [shape: bf16[2,8,8,128], index: 2, kind: input, shape index: {}]
  %s3 = inlined_call_operand.vmem [shape: bf16[128,128], index: 3, kind: input, shape index: {}]
  %s4 = inlined_call_operand.vmem [shape: f32[2,8,8,128], index: 4, kind: output, shape index: {}]
  %s5 = sld [smem:[#allocation0]]
  $region49: #{basic_block_forward.3} parent=0
    _
  %s7 = ssub.s32 1, %s5
  %s8 = scalar_select 0, %s7, %s5
  loop: start=0, step=1, limit=4
  $region2: #{basic_block_forward.3} parent=0 // loop_pre_header
    _
  $region3: #{basic_block_forward.3} parent=0 // loop_header
    %s10 = sphi 0, %s14
    %p11 = scmp.ge.s32.totalorder %s10, 4
    %s20 = sphi 0, %s22
    %s23 = sphi 0, %s20
    %s24 = sphi 0, %s23
    %s40 = sphi 0, %s24
    %s44 = sphi 0, %s44
    %s46 = sphi 0, %s44
    %s47 = sphi 0, %s46
    %s61 = sphi 0, %s47
    %s67 = sphi 0, %s69
    %s70 = sphi 0, %s67
    %s71 = sphi 0, %s70
    %s87 = sphi 0, %s71
    %s91 = sphi 0, %s91
    %s93 = sphi 0, %s91
    %s94 = sphi 0, %s93
    %s108 = sphi 0, %s94
    %s114 = sphi 0, %s116
    %s117 = sphi 0, %s114
    %s118 = sphi 0, %s117
    %s134 = sphi 0, %s118
  $region4: #{basic_block_forward.3} parent=0 // loop_header_branch
    %13 = sbr.rel (%p11) target = $region8
  $region5: #{basic_block_forward.3} parent=0 // loop_body
    %s15 = ssub.s32 %s10, 1
    %s16 = ssub.s32 %s10, 2
    %s17 = sadd.s32 %s10, 1
    %s18 = ssub.s32 %s10, %s17
    %p19 = scmp.eq.s32.totalorder %s18, 0
    %s21 = sadd.s32 %s20, 1
    %s22 = scalar_select %p19, %s20, %s21
    %p25 = pneg %p19
    %p26 = scmp.eq.s32.totalorder %s10, 1
    %p27 = por %p25, %p26
    %p28 = scmp.ne.s32.totalorder %s20, %s23
    %p29 = scmp.eq.s32.totalorder %s10, 0
    %p30 = por %p28, %p29
    %p31 = scmp.ne.s32.totalorder %s20, %s23
    %p32 = scmp.eq.s32.totalorder %s15, 1
    %p33 = por %p31, %p32
    %p34 = scmp.ne.s32.totalorder %s23, %s24
    %p35 = scmp.eq.s32.totalorder %s15, 0
    %p36 = por %p34, %p35
    %p37 = scmp.ne.s32.totalorder %s23, %s24
    %p38 = scmp.eq.s32.totalorder %s16, 1
    %p39 = por %p37, %p38
    %p41 = scmp.ne.s32.totalorder %s24, %s40
    %p42 = scmp.eq.s32.totalorder %s16, 0
    %p43 = por %p41, %p42
    %s45 = sadd.s32 %s44, 1
    %p48 = scmp.eq.s32.totalorder %s10, 1
    %p49 = scmp.ne.s32.totalorder %s44, %s46
    %p50 = scmp.eq.s32.totalorder %s10, 0
    %p51 = por %p49, %p50
    %p52 = scmp.ne.s32.totalorder %s44, %s46
    %p53 = scmp.eq.s32.totalorder %s15, 1
    %p54 = por %p52, %p53
    %p55 = scmp.ne.s32.totalorder %s46, %s47
    %p56 = scmp.eq.s32.totalorder %s15, 0
    %p57 = por %p55, %p56
    %p58 = scmp.ne.s32.totalorder %s46, %s47
    %p59 = scmp.eq.s32.totalorder %s16, 1
    %p60 = por %p58, %p59
    %p62 = scmp.ne.s32.totalorder %s47, %s61
    %p63 = scmp.eq.s32.totalorder %s16, 0
    %p64 = por %p62, %p63
    %s65 = ssub.s32 %s10, %s17
    %p66 = scmp.eq.s32.totalorder %s65, 0
    %s68 = sadd.s32 %s67, 1
    %s69 = scalar_select %p66, %s67, %s68
    %p72 = pneg %p66
    %p73 = scmp.eq.s32.totalorder %s10, 1
    %p74 = por %p72, %p73
    %p75 = scmp.ne.s32.totalorder %s67, %s70
    %p76 = scmp.eq.s32.totalorder %s10, 0
    %p77 = por %p75, %p76
    %p78 = scmp.ne.s32.totalorder %s67, %s70
    %p79 = scmp.eq.s32.totalorder %s15, 1
    %p80 = por %p78, %p79
    %p81 = scmp.ne.s32.totalorder %s70, %s71
    %p82 = scmp.eq.s32.totalorder %s15, 0
    %p83 = por %p81, %p82
    %p84 = scmp.ne.s32.totalorder %s70, %s71
    %p85 = scmp.eq.s32.totalorder %s16, 1
    %p86 = por %p84, %p85
    %p88 = scmp.ne.s32.totalorder %s71, %s87
    %p89 = scmp.eq.s32.totalorder %s16, 0
    %p90 = por %p88, %p89
    %s92 = sadd.s32 %s91, 1
    %p95 = scmp.eq.s32.totalorder %s10, 1
    %p96 = scmp.ne.s32.totalorder %s91, %s93
    %p97 = scmp.eq.s32.totalorder %s10, 0
    %p98 = por %p96, %p97
    %p99 = scmp.ne.s32.totalorder %s91, %s93
    %p100 = scmp.eq.s32.totalorder %s15, 1
    %p101 = por %p99, %p100
    %p102 = scmp.ne.s32.totalorder %s93, %s94
    %p103 = scmp.eq.s32.totalorder %s15, 0
    %p104 = por %p102, %p103
    %p105 = scmp.ne.s32.totalorder %s93, %s94
    %p106 = scmp.eq.s32.totalorder %s16, 1
    %p107 = por %p105, %p106
    %p109 = scmp.ne.s32.totalorder %s94, %s108
    %p110 = scmp.eq.s32.totalorder %s16, 0
    %p111 = por %p109, %p110
    %s112 = ssub.s32 %s10, %s17
    %p113 = scmp.eq.s32.totalorder %s112, 0
    %s115 = sadd.s32 %s114, 1
    %s116 = scalar_select %p113, %s114, %s115
    %p119 = pneg %p113
    %p120 = scmp.eq.s32.totalorder %s10, 1
    %p121 = por %p119, %p120
    %p122 = scmp.ne.s32.totalorder %s114, %s117
    %p123 = scmp.eq.s32.totalorder %s10, 0
    %p124 = por %p122, %p123
    %p125 = scmp.ne.s32.totalorder %s114, %s117
    %p126 = scmp.eq.s32.totalorder %s15, 1
    %p127 = por %p125, %p126
    %p128 = scmp.ne.s32.totalorder %s117, %s118
    %p129 = scmp.eq.s32.totalorder %s15, 0
    %p130 = por %p128, %p129
    %p131 = scmp.ne.s32.totalorder %s117, %s118
    %p132 = scmp.eq.s32.totalorder %s16, 1
    %p133 = por %p131, %p132
    %p135 = scmp.ne.s32.totalorder %s118, %s134
    %p136 = scmp.eq.s32.totalorder %s16, 0
    %p137 = por %p135, %p136
    %p138 = scmp.le.s32.totalorder 1, %s10
    %p139 = scmp.lt.s32.totalorder %s10, 3
    %p140 = pnand %p138, %p139
    %p141 = pneg %p140
    // Predicated region
    $region9: #{basic_block_forward.3} parent=5 // pred_check
      _
    $region10: #{basic_block_forward.3} parent=5 // pred_check_branch
      %143 = sbr.rel (%p140) target = $region12
    $region11: #{basic_block_forward.3} parent=5 // pred_region
      %s144 = ssub.s32 %s10, 1
      // Predicated region
      $region13: #{basic_block_forward.3} parent=11 // pred_check
        %p145 = pneg %p57
      $region14: #{basic_block_forward.3} parent=11 // pred_check_branch
        %147 = sbr.rel (%p145) target = $region16
      $region15: #{basic_block_forward.3} parent=11 // pred_region
        _
      $region16: #{basic_block_forward.3} parent=11 // pred_fallthru
        _
      // Predicated region
      $region17: #{basic_block_forward.3} parent=11 // pred_check
        %p148 = pneg %p104
      $region18: #{basic_block_forward.3} parent=11 // pred_check_branch
        %150 = sbr.rel (%p148) target = $region20
      $region19: #{basic_block_forward.3} parent=11 // pred_region
        _
      $region20: #{basic_block_forward.3} parent=11 // pred_fallthru
        _
    $region12: #{basic_block_forward.3} parent=5 // pred_fallthru
      _
    %p151 = scmp.lt.s32.totalorder %s10, 2
    // Predicated region
    $region21: #{basic_block_forward.3} parent=5 // pred_check
      %p152 = pneg %p151
    $region22: #{basic_block_forward.3} parent=5 // pred_check_branch
      %154 = sbr.rel (%p152) target = $region24
    $region23: #{basic_block_forward.3} parent=5 // pred_region
      // Predicated region
      $region25: #{basic_block_forward.3} parent=23 // pred_check
        %p155 = pneg %p30
      $region26: #{basic_block_forward.3} parent=23 // pred_check_branch
        %157 = sbr.rel (%p155) target = $region28
      $region27: #{basic_block_forward.3} parent=23 // pred_region
        %p158 = scmp.lt.s32.totalorder %s10, 1
        %s159 = scalar_select %p158, %s10, 1
        %s160 = smul.addr %s159, 20
        %s161 = smul.addr %s160, 4
        %s162 = scalar_lea.vmem %s0, %s161
      $region28: #{basic_block_forward.3} parent=23 // pred_fallthru
        _
      // Predicated region
      $region29: #{basic_block_forward.3} parent=23 // pred_check
        %p163 = pneg %p77
      $region30: #{basic_block_forward.3} parent=23 // pred_check_branch
        %165 = sbr.rel (%p163) target = $region32
      $region31: #{basic_block_forward.3} parent=23 // pred_region
        %p166 = scmp.lt.s32.totalorder %s10, 1
        %s167 = scalar_select %p166, %s10, 1
        %s168 = smul.addr %s167, 8
        %s169 = smul.addr %s168, 4
        %s170 = scalar_lea.vmem %s2, %s169
      $region32: #{basic_block_forward.3} parent=23 // pred_fallthru
        _
    $region24: #{basic_block_forward.3} parent=5 // pred_fallthru
      _
    %p171 = scmp.le.s32.totalorder 1, %s10
    %p172 = scmp.lt.s32.totalorder %s10, 3
    %p173 = pnand %p171, %p172
    %p174 = pneg %p173
    // Predicated region
    $region33: #{basic_block_forward.3} parent=5 // pred_check
      _
    $region34: #{basic_block_forward.3} parent=5 // pred_check_branch
      %176 = sbr.rel (%p173) target = $region36
    $region35: #{basic_block_forward.3} parent=5 // pred_region
      %s177 = ssub.s32 %s10, 1
      %p178 = scmp.lt.s32.totalorder %s15, 1
      %s179 = scalar_select %p178, %s15, 1
      %s180 = smul.addr %s179, 20
      %s181 = smul.addr %s180, 4
      %s182 = scalar_lea.vmem %s0, %s181
      %p183 = pneg %p36
      %p184 = pneg %p33
      %p185 = pneg %p57
      %p186 = pneg %p54
      %p187 = scmp.lt.s32.totalorder %s15, 1
      %s188 = scalar_select %p187, %s15, 1
      %s189 = smul.addr %s188, 8
      %s190 = smul.addr %s189, 4
      %s191 = scalar_lea.vmem %s2, %s190
      %p192 = pneg %p83
      %p193 = pneg %p80
      %p194 = pneg %p104
      %p195 = pneg %p101
      %p196 = pneg %p130
      %p197 = pneg %p127
      %p198 = scmp.lt.s32.totalorder %s15, 1
      %s199 = scalar_select %p198, %s15, 1
      %s200 = smul.addr %s199, 8
      %s201 = smul.addr %s200, 8
      %s202 = scalar_lea.vmem %s4, %s201
      %p203 = scmp.lt.s32.totalorder %s15, 1
      %s204 = scalar_select %p203, %s15, 1
      %s205 = smul.addr %s204, 20
      %s206 = smul.addr %s205, 4
      %s207 = scalar_lea.vmem %s0, %s206
      %p208 = scmp.lt.s32.totalorder %s15, 1
      %s209 = scalar_select %p208, %s15, 1
      %s210 = smul.addr %s209, 8
      %s211 = smul.addr %s210, 4
      %s212 = scalar_lea.vmem %s2, %s211
      %p213 = scmp.lt.s32.totalorder %s15, 1
      %s214 = scalar_select %p213, %s15, 1
      %s215 = smul.addr %s214, 8
      %s216 = smul.addr %s215, 8
      %s217 = scalar_lea.vmem %s4, %s216
      %v218 = vld [vmem:[%s212] sm:$0xf]
      %v219 = vld [vmem:[%s212 + $0x4] sm:$0xf]
      %v220 = vld [vmem:[%s212 + $0x8] sm:$0xf]
      %v221 = vld [vmem:[%s212 + $0xc] sm:$0xf]
      %v222 = vld [vmem:[%s212 + $0x10] sm:$0xf]
      %v223 = vld [vmem:[%s212 + $0x14] sm:$0xf]
      %v224 = vld [vmem:[%s212 + $0x18] sm:$0xf]
      %v225 = vld [vmem:[%s212 + $0x1c] sm:$0xf]
      %v226 = vld [vmem:[%s3] sm:$0xf]
      %v227 = vld [vmem:[%s3 + $0x4] sm:$0xf]
      %v228 = vld [vmem:[%s3 + $0x8] sm:$0xf]
      %v229 = vld [vmem:[%s3 + $0xc] sm:$0xf]
      %v230 = vld [vmem:[%s3 + $0x10] sm:$0xf]
      %v231 = vld [vmem:[%s3 + $0x14] sm:$0xf]
      %v232 = vld [vmem:[%s3 + $0x18] sm:$0xf]
      %v233 = vld [vmem:[%s3 + $0x1c] sm:$0xf]
      %v234 = vld [vmem:[%s3 + $0x20] sm:$0xf]
      %v235 = vld [vmem:[%s3 + $0x24] sm:$0xf]
      %v236 = vld [vmem:[%s3 + $0x28] sm:$0xf]
      %v237 = vld [vmem:[%s3 + $0x2c] sm:$0xf]
      %v238 = vld [vmem:[%s3 + $0x30] sm:$0xf]
      %v239 = vld [vmem:[%s3 + $0x34] sm:$0xf]
      %v240 = vld [vmem:[%s3 + $0x38] sm:$0xf]
      %v241 = vld [vmem:[%s3 + $0x3c] sm:$0xf]
      %v242 = vld [vmem:[%s207] sm:$0xf]
      %v243 = vld [vmem:[%s207 + $0x8] sm:$0xf]
      %v244 = vld [vmem:[%s207 + $0x10] sm:$0xf]
      %v245 = vld [vmem:[%s207 + $0x18] sm:$0xf]
      %v246 = vld [vmem:[%s207 + $0x20] sm:$0xf]
      %v247 = vld [vmem:[%s207 + $0x28] sm:$0xf]
      %v248 = vld [vmem:[%s207 + $0x30] sm:$0xf]
      %v249 = vld [vmem:[%s207 + $0x38] sm:$0xf]
      %v250 = vld [vmem:[%s1] sm:$0xf]
      %v251 = vld [vmem:[%s1 + $0x4] sm:$0xf]
      %v252 = vld [vmem:[%s1 + $0x8] sm:$0xf]
      %v253 = vld [vmem:[%s1 + $0xc] sm:$0xf]
      %v254 = vld [vmem:[%s1 + $0x10] sm:$0xf]
      %v255 = vld [vmem:[%s1 + $0x14] sm:$0xf]
      %v256 = vld [vmem:[%s1 + $0x18] sm:$0xf]
      %v257 = vld [vmem:[%s1 + $0x1c] sm:$0xf]
      %v258 = vld [vmem:[%s1 + $0x20] sm:$0xf]
      %v259 = vld [vmem:[%s1 + $0x24] sm:$0xf]
      %v260 = vld [vmem:[%s1 + $0x28] sm:$0xf]
      %v261 = vld [vmem:[%s1 + $0x2c] sm:$0xf]
      %v262 = vld [vmem:[%s1 + $0x30] sm:$0xf]
      %v263 = vld [vmem:[%s1 + $0x34] sm:$0xf]
      %v264 = vld [vmem:[%s1 + $0x38] sm:$0xf]
      %v265 = vld [vmem:[%s1 + $0x3c] sm:$0xf]
      %v274 = vunpack.c.l.b16 %v242
      %v275 = vunpack.c.l.b16 %v243
      %v276 = vunpack.c.l.b16 %v244
      %v277 = vunpack.c.l.b16 %v245
      %v278 = vunpack.c.l.b16 %v246
      %v279 = vunpack.c.l.b16 %v247
      %v280 = vunpack.c.l.b16 %v248
      %v281 = vunpack.c.l.b16 %v249
      %v282 = vpack.c.b16 %v275, %v274
      %v283 = vpack.c.b16 %v277, %v276
      %v284 = vpack.c.b16 %v279, %v278
      %v285 = vpack.c.b16 %v281, %v280
      %v306 = vunpack.c.l.b16 %v250
      %v307 = vunpack.c.l.b16 %v251
      %v308 = vunpack.c.l.b16 %v252
      %v309 = vunpack.c.l.b16 %v253
      %v310 = vunpack.c.l.b16 %v254
      %v311 = vunpack.c.l.b16 %v255
      %v312 = vunpack.c.l.b16 %v256
      %v313 = vunpack.c.l.b16 %v257
      %v314 = vunpack.c.l.b16 %v258
      %v315 = vunpack.c.l.b16 %v259
      %v316 = vunpack.c.l.b16 %v260
      %v317 = vunpack.c.l.b16 %v261
      %v318 = vunpack.c.l.b16 %v262
      %v319 = vunpack.c.l.b16 %v263
      %v320 = vunpack.c.l.b16 %v264
      %v321 = vunpack.c.l.b16 %v265
      %v322 = vpack.c.b16 %v307, %v306
      %v323 = vpack.c.b16 %v309, %v308
      %v324 = vpack.c.b16 %v311, %v310
      %v325 = vpack.c.b16 %v313, %v312
      %v326 = vpack.c.b16 %v315, %v314
      %v327 = vpack.c.b16 %v317, %v316
      %v328 = vpack.c.b16 %v319, %v318
      %v329 = vpack.c.b16 %v321, %v320
      %338 = vmatpush.bf16.msra.mxu0 %v329
      %339 = vmatpush.bf16.msra.mxu0 %v328
      %340 = vmatpush.bf16.msra.mxu0 %v327
      %341 = vmatpush.bf16.msra.mxu0 %v326
      %342 = vmatpush.bf16.msra.mxu0 %v325
      %343 = vmatpush.bf16.msra.mxu0 %v324
      %344 = vmatpush.bf16.msra.mxu0 %v323
      %345 = vmatpush.bf16.msra.mxu0 %v322
      %346 = vmatmul.bf16.gmra.mxu0 %v282
      %v347 = vpop.f32.mrf.mxu0
      %v348 = vadd.f32 0.0, %v347
      %v349 = vpop.f32.mrf.mxu0
      %v350 = vadd.f32 0.0, %v349
      %351 = vmatmul.bf16.gmra.mxu0 %v283
      %v352 = vpop.f32.mrf.mxu0
      %v353 = vadd.f32 0.0, %v352
      %v354 = vpop.f32.mrf.mxu0
      %v355 = vadd.f32 0.0, %v354
      %356 = vmatmul.bf16.gmra.mxu0 %v284
      %v357 = vpop.f32.mrf.mxu0
      %v358 = vadd.f32 0.0, %v357
      %v359 = vpop.f32.mrf.mxu0
      %v360 = vadd.f32 0.0, %v359
      %361 = vmatmul.bf16.gmra.mxu0 %v285
      %v362 = vpop.f32.mrf.mxu0
      %v363 = vadd.f32 0.0, %v362
      %v364 = vpop.f32.mrf.mxu0
      %v365 = vadd.f32 0.0, %v364
      %366 = vdwg.mxu0
      %v375 = vunpack.c.l.b16 %v218
      %v376 = vunpack.c.l.b16 %v219
      %v377 = vunpack.c.l.b16 %v220
      %v378 = vunpack.c.l.b16 %v221
      %v379 = vunpack.c.l.b16 %v222
      %v380 = vunpack.c.l.b16 %v223
      %v381 = vunpack.c.l.b16 %v224
      %v382 = vunpack.c.l.b16 %v225
      %v383 = vpack.c.b16 %v376, %v375
      %v384 = vpack.c.b16 %v378, %v377
      %v385 = vpack.c.b16 %v380, %v379
      %v386 = vpack.c.b16 %v382, %v381
      %v407 = vunpack.c.l.b16 %v226
      %v408 = vunpack.c.l.b16 %v227
      %v409 = vunpack.c.l.b16 %v228
      %v410 = vunpack.c.l.b16 %v229
      %v411 = vunpack.c.l.b16 %v230
      %v412 = vunpack.c.l.b16 %v231
      %v413 = vunpack.c.l.b16 %v232
      %v414 = vunpack.c.l.b16 %v233
      %v415 = vunpack.c.l.b16 %v234
      %v416 = vunpack.c.l.b16 %v235
      %v417 = vunpack.c.l.b16 %v236
      %v418 = vunpack.c.l.b16 %v237
      %v419 = vunpack.c.l.b16 %v238
      %v420 = vunpack.c.l.b16 %v239
      %v421 = vunpack.c.l.b16 %v240
      %v422 = vunpack.c.l.b16 %v241
      %v423 = vpack.c.b16 %v408, %v407
      %v424 = vpack.c.b16 %v410, %v409
      %v425 = vpack.c.b16 %v412, %v411
      %v426 = vpack.c.b16 %v414, %v413
      %v427 = vpack.c.b16 %v416, %v415
      %v428 = vpack.c.b16 %v418, %v417
      %v429 = vpack.c.b16 %v420, %v419
      %v430 = vpack.c.b16 %v422, %v421
      %439 = vmatpush.bf16.msra.mxu0 %v430
      %440 = vmatpush.bf16.msra.mxu0 %v429
      %441 = vmatpush.bf16.msra.mxu0 %v428
      %442 = vmatpush.bf16.msra.mxu0 %v427
      %443 = vmatpush.bf16.msra.mxu0 %v426
      %444 = vmatpush.bf16.msra.mxu0 %v425
      %445 = vmatpush.bf16.msra.mxu0 %v424
      %446 = vmatpush.bf16.msra.mxu0 %v423
      %447 = vmatmul.bf16.gmra.mxu0 %v383
      %v448 = vpop.f32.mrf.mxu0
      %v449 = vadd.f32 %v348, %v448
      %v450 = vpop.f32.mrf.mxu0
      %v451 = vadd.f32 %v350, %v450
      %452 = vmatmul.bf16.gmra.mxu0 %v384
      %v453 = vpop.f32.mrf.mxu0
      %v454 = vadd.f32 %v353, %v453
      %v455 = vpop.f32.mrf.mxu0
      %v456 = vadd.f32 %v355, %v455
      %457 = vmatmul.bf16.gmra.mxu0 %v385
      %v458 = vpop.f32.mrf.mxu0
      %v459 = vadd.f32 %v358, %v458
      %v460 = vpop.f32.mrf.mxu0
      %v461 = vadd.f32 %v360, %v460
      %462 = vmatmul.bf16.gmra.mxu0 %v386
      %v463 = vpop.f32.mrf.mxu0
      %v464 = vadd.f32 %v363, %v463
      %v465 = vpop.f32.mrf.mxu0
      %v466 = vadd.f32 %v365, %v465
      %467 = vdwg.mxu0
      %v468 = vld [vmem:[%s207] sm:$0xf]
      %v469 = vld [vmem:[%s207 + $0x4] sm:$0x1]
      %v470 = vld [vmem:[%s207 + $0x8] sm:$0xf]
      %v471 = vld [vmem:[%s207 + $0xc] sm:$0x1]
      %v472 = vld [vmem:[%s207 + $0x10] sm:$0xf]
      %v473 = vld [vmem:[%s207 + $0x14] sm:$0x1]
      %v474 = vld [vmem:[%s207 + $0x18] sm:$0xf]
      %v475 = vld [vmem:[%s207 + $0x1c] sm:$0x1]
      %v476 = vld [vmem:[%s207 + $0x20] sm:$0xf]
      %v477 = vld [vmem:[%s207 + $0x24] sm:$0x1]
      %v478 = vld [vmem:[%s207 + $0x28] sm:$0xf]
      %v479 = vld [vmem:[%s207 + $0x2c] sm:$0x1]
      %v480 = vld [vmem:[%s207 + $0x30] sm:$0xf]
      %v481 = vld [vmem:[%s207 + $0x34] sm:$0x1]
      %v482 = vld [vmem:[%s207 + $0x38] sm:$0xf]
      %v483 = vld [vmem:[%s207 + $0x3c] sm:$0x1]
      %vm484 = vsmask.f32 3328
      %vm485 = vsmask.f32 7440
      %vm486 = vmor %vm484, %vm485
      %v488 = vshrl.u32 %v468, 16
      %v490 = vrot.slane %v488, 4
      %v491 = vshll.u32 %v468, 16
      %v493 = vrot.slane %v491, 5
      %v494 = vor.u32 %v490, %v493
      %v495 = vrot.slane %v494, 4
      %v497 = vshll.u32 %v469, 16
      %v499 = vrot.slane %v497, 5
      %v500 = vsel %vm486, %v495, %v499
      %v502 = vshrl.u32 %v470, 16
      %v504 = vrot.slane %v502, 4
      %v505 = vshll.u32 %v470, 16
      %v507 = vrot.slane %v505, 5
      %v508 = vor.u32 %v504, %v507
      %v509 = vrot.slane %v508, 4
      %v511 = vshll.u32 %v471, 16
      %v513 = vrot.slane %v511, 5
      %v514 = vsel %vm486, %v509, %v513
      %v516 = vshrl.u32 %v472, 16
      %v518 = vrot.slane %v516, 4
      %v519 = vshll.u32 %v472, 16
      %v521 = vrot.slane %v519, 5
      %v522 = vor.u32 %v518, %v521
      %v523 = vrot.slane %v522, 4
      %v525 = vshll.u32 %v473, 16
      %v527 = vrot.slane %v525, 5
      %v528 = vsel %vm486, %v523, %v527
      %v530 = vshrl.u32 %v474, 16
      %v532 = vrot.slane %v530, 4
      %v533 = vshll.u32 %v474, 16
      %v535 = vrot.slane %v533, 5
      %v536 = vor.u32 %v532, %v535
      %v537 = vrot.slane %v536, 4
      %v539 = vshll.u32 %v475, 16
      %v541 = vrot.slane %v539, 5
      %v542 = vsel %vm486, %v537, %v541
      %v544 = vshrl.u32 %v476, 16
      %v546 = vrot.slane %v544, 4
      %v547 = vshll.u32 %v476, 16
      %v549 = vrot.slane %v547, 5
      %v550 = vor.u32 %v546, %v549
      %v551 = vrot.slane %v550, 4
      %v553 = vshll.u32 %v477, 16
      %v555 = vrot.slane %v553, 5
      %v556 = vsel %vm486, %v551, %v555
      %v558 = vshrl.u32 %v478, 16
      %v560 = vrot.slane %v558, 4
      %v561 = vshll.u32 %v478, 16
      %v563 = vrot.slane %v561, 5
      %v564 = vor.u32 %v560, %v563
      %v565 = vrot.slane %v564, 4
      %v567 = vshll.u32 %v479, 16
      %v569 = vrot.slane %v567, 5
      %v570 = vsel %vm486, %v565, %v569
      %v572 = vshrl.u32 %v480, 16
      %v574 = vrot.slane %v572, 4
      %v575 = vshll.u32 %v480, 16
      %v577 = vrot.slane %v575, 5
      %v578 = vor.u32 %v574, %v577
      %v579 = vrot.slane %v578, 4
      %v581 = vshll.u32 %v481, 16
      %v583 = vrot.slane %v581, 5
      %v584 = vsel %vm486, %v579, %v583
      %v586 = vshrl.u32 %v482, 16
      %v588 = vrot.slane %v586, 4
      %v589 = vshll.u32 %v482, 16
      %v591 = vrot.slane %v589, 5
      %v592 = vor.u32 %v588, %v591
      %v593 = vrot.slane %v592, 4
      %v595 = vshll.u32 %v483, 16
      %v597 = vrot.slane %v595, 5
      %v598 = vsel %vm486, %v593, %v597
      %s599 = scalar_lea.vmem %s1, 64
      %v600 = vld [vmem:[%s599] sm:$0xf]
      %v601 = vld [vmem:[%s599 + $0x4] sm:$0xf]
      %v602 = vld [vmem:[%s599 + $0x8] sm:$0xf]
      %v603 = vld [vmem:[%s599 + $0xc] sm:$0xf]
      %v604 = vld [vmem:[%s599 + $0x10] sm:$0xf]
      %v605 = vld [vmem:[%s599 + $0x14] sm:$0xf]
      %v606 = vld [vmem:[%s599 + $0x18] sm:$0xf]
      %v607 = vld [vmem:[%s599 + $0x1c] sm:$0xf]
      %v608 = vld [vmem:[%s599 + $0x20] sm:$0xf]
      %v609 = vld [vmem:[%s599 + $0x24] sm:$0xf]
      %v610 = vld [vmem:[%s599 + $0x28] sm:$0xf]
      %v611 = vld [vmem:[%s599 + $0x2c] sm:$0xf]
      %v612 = vld [vmem:[%s599 + $0x30] sm:$0xf]
      %v613 = vld [vmem:[%s599 + $0x34] sm:$0xf]
      %v614 = vld [vmem:[%s599 + $0x38] sm:$0xf]
      %v615 = vld [vmem:[%s599 + $0x3c] sm:$0xf]
      %v616 = vunpack.c.l.b16 %v500
      %v617 = vunpack.c.l.b16 %v514
      %v618 = vunpack.c.l.b16 %v528
      %v619 = vunpack.c.l.b16 %v542
      %v620 = vunpack.c.l.b16 %v556
      %v621 = vunpack.c.l.b16 %v570
      %v622 = vunpack.c.l.b16 %v584
      %v623 = vunpack.c.l.b16 %v598
      %v624 = vpack.c.b16 %v617, %v616
      %v625 = vpack.c.b16 %v619, %v618
      %v626 = vpack.c.b16 %v621, %v620
      %v627 = vpack.c.b16 %v623, %v622
      %v648 = vunpack.c.l.b16 %v600
      %v649 = vunpack.c.l.b16 %v601
      %v650 = vunpack.c.l.b16 %v602
      %v651 = vunpack.c.l.b16 %v603
      %v652 = vunpack.c.l.b16 %v604
      %v653 = vunpack.c.l.b16 %v605
      %v654 = vunpack.c.l.b16 %v606
      %v655 = vunpack.c.l.b16 %v607
      %v656 = vunpack.c.l.b16 %v608
      %v657 = vunpack.c.l.b16 %v609
      %v658 = vunpack.c.l.b16 %v610
      %v659 = vunpack.c.l.b16 %v611
      %v660 = vunpack.c.l.b16 %v612
      %v661 = vunpack.c.l.b16 %v613
      %v662 = vunpack.c.l.b16 %v614
      %v663 = vunpack.c.l.b16 %v615
      %v664 = vpack.c.b16 %v649, %v648
      %v665 = vpack.c.b16 %v651, %v650
      %v666 = vpack.c.b16 %v653, %v652
      %v667 = vpack.c.b16 %v655, %v654
      %v668 = vpack.c.b16 %v657, %v656
      %v669 = vpack.c.b16 %v659, %v658
      %v670 = vpack.c.b16 %v661, %v660
      %v671 = vpack.c.b16 %v663, %v662
      %680 = vmatpush.bf16.msra.mxu0 %v671
      %681 = vmatpush.bf16.msra.mxu0 %v670
      %682 = vmatpush.bf16.msra.mxu0 %v669
      %683 = vmatpush.bf16.msra.mxu0 %v668
      %684 = vmatpush.bf16.msra.mxu0 %v667
      %685 = vmatpush.bf16.msra.mxu0 %v666
      %686 = vmatpush.bf16.msra.mxu0 %v665
      %687 = vmatpush.bf16.msra.mxu0 %v664
      %688 = vmatmul.bf16.gmra.mxu0 %v624
      %v689 = vpop.f32.mrf.mxu0
      %v690 = vadd.f32 0.0, %v689
      %v691 = vpop.f32.mrf.mxu0
      %v692 = vadd.f32 0.0, %v691
      %693 = vmatmul.bf16.gmra.mxu0 %v625
      %v694 = vpop.f32.mrf.mxu0
      %v695 = vadd.f32 0.0, %v694
      %v696 = vpop.f32.mrf.mxu0
      %v697 = vadd.f32 0.0, %v696
      %698 = vmatmul.bf16.gmra.mxu0 %v626
      %v699 = vpop.f32.mrf.mxu0
      %v700 = vadd.f32 0.0, %v699
      %v701 = vpop.f32.mrf.mxu0
      %v702 = vadd.f32 0.0, %v701
      %703 = vmatmul.bf16.gmra.mxu0 %v627
      %v704 = vpop.f32.mrf.mxu0
      %v705 = vadd.f32 0.0, %v704
      %v706 = vpop.f32.mrf.mxu0
      %v707 = vadd.f32 0.0, %v706
      %708 = vdwg.mxu0
      %v709 = vadd.f32 %v449, %v690
      %v710 = vadd.f32 %v451, %v692
      %v711 = vadd.f32 %v454, %v695
      %v712 = vadd.f32 %v456, %v697
      %v713 = vadd.f32 %v459, %v700
      %v714 = vadd.f32 %v461, %v702
      %v715 = vadd.f32 %v464, %v705
      %v716 = vadd.f32 %v466, %v707
      %v717 = vld [vmem:[%s207] sm:$0xe]
      %v718 = vld [vmem:[%s207 + $0x8] sm:$0xe]
      %v719 = vld [vmem:[%s207 + $0x10] sm:$0xe]
      %v720 = vld [vmem:[%s207 + $0x18] sm:$0xe]
      %v721 = vld [vmem:[%s207 + $0x20] sm:$0xe]
      %v722 = vld [vmem:[%s207 + $0x28] sm:$0xe]
      %v723 = vld [vmem:[%s207 + $0x30] sm:$0xe]
      %v724 = vld [vmem:[%s207 + $0x38] sm:$0xe]
      %vm741 = vcmask 1042432
      %vm742 = vcmask 1046532
      %vm743 = vmor %vm741, %vm742
      %v744 = vrot.slane %v717, 5
      %v745 = vrot.slane %v744, 4
      %v746 = vrot.slane %v469, 5
      %v747 = vsel %vm743, %v745, %v746
      %v748 = vrot.slane %v718, 5
      %v749 = vrot.slane %v748, 4
      %v750 = vrot.slane %v471, 5
      %v751 = vsel %vm743, %v749, %v750
      %v752 = vrot.slane %v719, 5
      %v753 = vrot.slane %v752, 4
      %v754 = vrot.slane %v473, 5
      %v755 = vsel %vm743, %v753, %v754
      %v756 = vrot.slane %v720, 5
      %v757 = vrot.slane %v756, 4
      %v758 = vrot.slane %v475, 5
      %v759 = vsel %vm743, %v757, %v758
      %v760 = vrot.slane %v721, 5
      %v761 = vrot.slane %v760, 4
      %v762 = vrot.slane %v477, 5
      %v763 = vsel %vm743, %v761, %v762
      %v764 = vrot.slane %v722, 5
      %v765 = vrot.slane %v764, 4
      %v766 = vrot.slane %v479, 5
      %v767 = vsel %vm743, %v765, %v766
      %v768 = vrot.slane %v723, 5
      %v769 = vrot.slane %v768, 4
      %v770 = vrot.slane %v481, 5
      %v771 = vsel %vm743, %v769, %v770
      %v772 = vrot.slane %v724, 5
      %v773 = vrot.slane %v772, 4
      %v774 = vrot.slane %v483, 5
      %v775 = vsel %vm743, %v773, %v774
      %s776 = scalar_lea.vmem %s1, 128
      %v777 = vld [vmem:[%s776] sm:$0xf]
      %v778 = vld [vmem:[%s776 + $0x4] sm:$0xf]
      %v779 = vld [vmem:[%s776 + $0x8] sm:$0xf]
      %v780 = vld [vmem:[%s776 + $0xc] sm:$0xf]
      %v781 = vld [vmem:[%s776 + $0x10] sm:$0xf]
      %v782 = vld [vmem:[%s776 + $0x14] sm:$0xf]
      %v783 = vld [vmem:[%s776 + $0x18] sm:$0xf]
      %v784 = vld [vmem:[%s776 + $0x1c] sm:$0xf]
      %v785 = vld [vmem:[%s776 + $0x20] sm:$0xf]
      %v786 = vld [vmem:[%s776 + $0x24] sm:$0xf]
      %v787 = vld [vmem:[%s776 + $0x28] sm:$0xf]
      %v788 = vld [vmem:[%s776 + $0x2c] sm:$0xf]
      %v789 = vld [vmem:[%s776 + $0x30] sm:$0xf]
      %v790 = vld [vmem:[%s776 + $0x34] sm:$0xf]
      %v791 = vld [vmem:[%s776 + $0x38] sm:$0xf]
      %v792 = vld [vmem:[%s776 + $0x3c] sm:$0xf]
      %v793 = vunpack.c.l.b16 %v747
      %v794 = vunpack.c.l.b16 %v751
      %v795 = vunpack.c.l.b16 %v755
      %v796 = vunpack.c.l.b16 %v759
      %v797 = vunpack.c.l.b16 %v763
      %v798 = vunpack.c.l.b16 %v767
      %v799 = vunpack.c.l.b16 %v771
      %v800 = vunpack.c.l.b16 %v775
      %v801 = vpack.c.b16 %v794, %v793
      %v802 = vpack.c.b16 %v796, %v795
      %v803 = vpack.c.b16 %v798, %v797
      %v804 = vpack.c.b16 %v800, %v799
      %v825 = vunpack.c.l.b16 %v777
      %v826 = vunpack.c.l.b16 %v778
      %v827 = vunpack.c.l.b16 %v779
      %v828 = vunpack.c.l.b16 %v780
      %v829 = vunpack.c.l.b16 %v781
      %v830 = vunpack.c.l.b16 %v782
      %v831 = vunpack.c.l.b16 %v783
      %v832 = vunpack.c.l.b16 %v784
      %v833 = vunpack.c.l.b16 %v785
      %v834 = vunpack.c.l.b16 %v786
      %v835 = vunpack.c.l.b16 %v787
      %v836 = vunpack.c.l.b16 %v788
      %v837 = vunpack.c.l.b16 %v789
      %v838 = vunpack.c.l.b16 %v790
      %v839 = vunpack.c.l.b16 %v791
      %v840 = vunpack.c.l.b16 %v792
      %v841 = vpack.c.b16 %v826, %v825
      %v842 = vpack.c.b16 %v828, %v827
      %v843 = vpack.c.b16 %v830, %v829
      %v844 = vpack.c.b16 %v832, %v831
      %v845 = vpack.c.b16 %v834, %v833
      %v846 = vpack.c.b16 %v836, %v835
      %v847 = vpack.c.b16 %v838, %v837
      %v848 = vpack.c.b16 %v840, %v839
      %857 = vmatpush.bf16.msra.mxu0 %v848
      %858 = vmatpush.bf16.msra.mxu0 %v847
      %859 = vmatpush.bf16.msra.mxu0 %v846
      %860 = vmatpush.bf16.msra.mxu0 %v845
      %861 = vmatpush.bf16.msra.mxu0 %v844
      %862 = vmatpush.bf16.msra.mxu0 %v843
      %863 = vmatpush.bf16.msra.mxu0 %v842
      %864 = vmatpush.bf16.msra.mxu0 %v841
      %865 = vmatmul.bf16.gmra.mxu0 %v801
      %v866 = vpop.f32.mrf.mxu0
      %v867 = vadd.f32 0.0, %v866
      %v868 = vpop.f32.mrf.mxu0
      %v869 = vadd.f32 0.0, %v868
      %870 = vmatmul.bf16.gmra.mxu0 %v802
      %v871 = vpop.f32.mrf.mxu0
      %v872 = vadd.f32 0.0, %v871
      %v873 = vpop.f32.mrf.mxu0
      %v874 = vadd.f32 0.0, %v873
      %875 = vmatmul.bf16.gmra.mxu0 %v803
      %v876 = vpop.f32.mrf.mxu0
      %v877 = vadd.f32 0.0, %v876
      %v878 = vpop.f32.mrf.mxu0
      %v879 = vadd.f32 0.0, %v878
      %880 = vmatmul.bf16.gmra.mxu0 %v804
      %v881 = vpop.f32.mrf.mxu0
      %v882 = vadd.f32 0.0, %v881
      %v883 = vpop.f32.mrf.mxu0
      %v884 = vadd.f32 0.0, %v883
      %885 = vdwg.mxu0
      %v886 = vadd.f32 %v709, %v867
      %v887 = vadd.f32 %v710, %v869
      %v888 = vadd.f32 %v711, %v872
      %v889 = vadd.f32 %v712, %v874
      %v890 = vadd.f32 %v713, %v877
      %v891 = vadd.f32 %v714, %v879
      %v892 = vadd.f32 %v715, %v882
      %v893 = vadd.f32 %v716, %v884
      %s894 = scalar_lea.vmem %s207, 8
      %v895 = vld [vmem:[%s894] sm:$0xf]
      %v896 = vld [vmem:[%s894 + $0x8] sm:$0xf]
      %v897 = vld [vmem:[%s894 + $0x10] sm:$0xf]
      %v898 = vld [vmem:[%s894 + $0x18] sm:$0xf]
      %v899 = vld [vmem:[%s894 + $0x20] sm:$0xf]
      %v900 = vld [vmem:[%s894 + $0x28] sm:$0xf]
      %v901 = vld [vmem:[%s894 + $0x30] sm:$0xf]
      %v902 = vld [vmem:[%s894 + $0x38] sm:$0xf]
      %s903 = scalar_lea.vmem %s1, 192
      %v904 = vld [vmem:[%s903] sm:$0xf]
      %v905 = vld [vmem:[%s903 + $0x4] sm:$0xf]
      %v906 = vld [vmem:[%s903 + $0x8] sm:$0xf]
      %v907 = vld [vmem:[%s903 + $0xc] sm:$0xf]
      %v908 = vld [vmem:[%s903 + $0x10] sm:$0xf]
      %v909 = vld [vmem:[%s903 + $0x14] sm:$0xf]
      %v910 = vld [vmem:[%s903 + $0x18] sm:$0xf]
      %v911 = vld [vmem:[%s903 + $0x1c] sm:$0xf]
      %v912 = vld [vmem:[%s903 + $0x20] sm:$0xf]
      %v913 = vld [vmem:[%s903 + $0x24] sm:$0xf]
      %v914 = vld [vmem:[%s903 + $0x28] sm:$0xf]
      %v915 = vld [vmem:[%s903 + $0x2c] sm:$0xf]
      %v916 = vld [vmem:[%s903 + $0x30] sm:$0xf]
      %v917 = vld [vmem:[%s903 + $0x34] sm:$0xf]
      %v918 = vld [vmem:[%s903 + $0x38] sm:$0xf]
      %v919 = vld [vmem:[%s903 + $0x3c] sm:$0xf]
      %v928 = vunpack.c.l.b16 %v895
      %v929 = vunpack.c.l.b16 %v896
      %v930 = vunpack.c.l.b16 %v897
      %v931 = vunpack.c.l.b16 %v898
      %v932 = vunpack.c.l.b16 %v899
      %v933 = vunpack.c.l.b16 %v900
      %v934 = vunpack.c.l.b16 %v901
      %v935 = vunpack.c.l.b16 %v902
      %v936 = vpack.c.b16 %v929, %v928
      %v937 = vpack.c.b16 %v931, %v930
      %v938 = vpack.c.b16 %v933, %v932
      %v939 = vpack.c.b16 %v935, %v934
      %v960 = vunpack.c.l.b16 %v904
      %v961 = vunpack.c.l.b16 %v905
      %v962 = vunpack.c.l.b16 %v906
      %v963 = vunpack.c.l.b16 %v907
      %v964 = vunpack.c.l.b16 %v908
      %v965 = vunpack.c.l.b16 %v909
      %v966 = vunpack.c.l.b16 %v910
      %v967 = vunpack.c.l.b16 %v911
      %v968 = vunpack.c.l.b16 %v912
      %v969 = vunpack.c.l.b16 %v913
      %v970 = vunpack.c.l.b16 %v914
      %v971 = vunpack.c.l.b16 %v915
      %v972 = vunpack.c.l.b16 %v916
      %v973 = vunpack.c.l.b16 %v917
      %v974 = vunpack.c.l.b16 %v918
      %v975 = vunpack.c.l.b16 %v919
      %v976 = vpack.c.b16 %v961, %v960
      %v977 = vpack.c.b16 %v963, %v962
      %v978 = vpack.c.b16 %v965, %v964
      %v979 = vpack.c.b16 %v967, %v966
      %v980 = vpack.c.b16 %v969, %v968
      %v981 = vpack.c.b16 %v971, %v970
      %v982 = vpack.c.b16 %v973, %v972
      %v983 = vpack.c.b16 %v975, %v974
      %992 = vmatpush.bf16.msra.mxu0 %v983
      %993 = vmatpush.bf16.msra.mxu0 %v982
      %994 = vmatpush.bf16.msra.mxu0 %v981
      %995 = vmatpush.bf16.msra.mxu0 %v980
      %996 = vmatpush.bf16.msra.mxu0 %v979
      %997 = vmatpush.bf16.msra.mxu0 %v978
      %998 = vmatpush.bf16.msra.mxu0 %v977
      %999 = vmatpush.bf16.msra.mxu0 %v976
      %1000 = vmatmul.bf16.gmra.mxu0 %v936
      %v1001 = vpop.f32.mrf.mxu0
      %v1002 = vadd.f32 0.0, %v1001
      %v1003 = vpop.f32.mrf.mxu0
      %v1004 = vadd.f32 0.0, %v1003
      %1005 = vmatmul.bf16.gmra.mxu0 %v937
      %v1006 = vpop.f32.mrf.mxu0
      %v1007 = vadd.f32 0.0, %v1006
      %v1008 = vpop.f32.mrf.mxu0
      %v1009 = vadd.f32 0.0, %v1008
      %1010 = vmatmul.bf16.gmra.mxu0 %v938
      %v1011 = vpop.f32.mrf.mxu0
      %v1012 = vadd.f32 0.0, %v1011
      %v1013 = vpop.f32.mrf.mxu0
      %v1014 = vadd.f32 0.0, %v1013
      %1015 = vmatmul.bf16.gmra.mxu0 %v939
      %v1016 = vpop.f32.mrf.mxu0
      %v1017 = vadd.f32 0.0, %v1016
      %v1018 = vpop.f32.mrf.mxu0
      %v1019 = vadd.f32 0.0, %v1018
      %1020 = vdwg.mxu0
      %v1021 = vadd.f32 %v886, %v1002
      %v1022 = vadd.f32 %v887, %v1004
      %v1023 = vadd.f32 %v888, %v1007
      %v1024 = vadd.f32 %v889, %v1009
      %v1025 = vadd.f32 %v890, %v1012
      %v1026 = vadd.f32 %v891, %v1014
      %v1027 = vadd.f32 %v892, %v1017
      %v1028 = vadd.f32 %v893, %v1019
      %v1029 = vld [vmem:[%s894] sm:$0xf]
      %v1030 = vld [vmem:[%s894 + $0x4] sm:$0x1]
      %v1031 = vld [vmem:[%s894 + $0x8] sm:$0xf]
      %v1032 = vld [vmem:[%s894 + $0xc] sm:$0x1]
      %v1033 = vld [vmem:[%s894 + $0x10] sm:$0xf]
      %v1034 = vld [vmem:[%s894 + $0x14] sm:$0x1]
      %v1035 = vld [vmem:[%s894 + $0x18] sm:$0xf]
      %v1036 = vld [vmem:[%s894 + $0x1c] sm:$0x1]
      %v1037 = vld [vmem:[%s894 + $0x20] sm:$0xf]
      %v1038 = vld [vmem:[%s894 + $0x24] sm:$0x1]
      %v1039 = vld [vmem:[%s894 + $0x28] sm:$0xf]
      %v1040 = vld [vmem:[%s894 + $0x2c] sm:$0x1]
      %v1041 = vld [vmem:[%s894 + $0x30] sm:$0xf]
      %v1042 = vld [vmem:[%s894 + $0x34] sm:$0x1]
      %v1043 = vld [vmem:[%s894 + $0x38] sm:$0xf]
      %v1044 = vld [vmem:[%s894 + $0x3c] sm:$0x1]
      %v1046 = vshrl.u32 %v1029, 16
      %v1048 = vrot.slane %v1046, 4
      %v1049 = vshll.u32 %v1029, 16
      %v1051 = vrot.slane %v1049, 5
      %v1052 = vor.u32 %v1048, %v1051
      %v1053 = vrot.slane %v1052, 4
      %v1055 = vshll.u32 %v1030, 16
      %v1057 = vrot.slane %v1055, 5
      %v1058 = vsel %vm486, %v1053, %v1057
      %v1060 = vshrl.u32 %v1031, 16
      %v1062 = vrot.slane %v1060, 4
      %v1063 = vshll.u32 %v1031, 16
      %v1065 = vrot.slane %v1063, 5
      %v1066 = vor.u32 %v1062, %v1065
      %v1067 = vrot.slane %v1066, 4
      %v1069 = vshll.u32 %v1032, 16
      %v1071 = vrot.slane %v1069, 5
      %v1072 = vsel %vm486, %v1067, %v1071
      %v1074 = vshrl.u32 %v1033, 16
      %v1076 = vrot.slane %v1074, 4
      %v1077 = vshll.u32 %v1033, 16
      %v1079 = vrot.slane %v1077, 5
      %v1080 = vor.u32 %v1076, %v1079
      %v1081 = vrot.slane %v1080, 4
      %v1083 = vshll.u32 %v1034, 16
      %v1085 = vrot.slane %v1083, 5
      %v1086 = vsel %vm486, %v1081, %v1085
      %v1088 = vshrl.u32 %v1035, 16
      %v1090 = vrot.slane %v1088, 4
      %v1091 = vshll.u32 %v1035, 16
      %v1093 = vrot.slane %v1091, 5
      %v1094 = vor.u32 %v1090, %v1093
      %v1095 = vrot.slane %v1094, 4
      %v1097 = vshll.u32 %v1036, 16
      %v1099 = vrot.slane %v1097, 5
      %v1100 = vsel %vm486, %v1095, %v1099
      %v1102 = vshrl.u32 %v1037, 16
      %v1104 = vrot.slane %v1102, 4
      %v1105 = vshll.u32 %v1037, 16
      %v1107 = vrot.slane %v1105, 5
      %v1108 = vor.u32 %v1104, %v1107
      %v1109 = vrot.slane %v1108, 4
      %v1111 = vshll.u32 %v1038, 16
      %v1113 = vrot.slane %v1111, 5
      %v1114 = vsel %vm486, %v1109, %v1113
      %v1116 = vshrl.u32 %v1039, 16
      %v1118 = vrot.slane %v1116, 4
      %v1119 = vshll.u32 %v1039, 16
      %v1121 = vrot.slane %v1119, 5
      %v1122 = vor.u32 %v1118, %v1121
      %v1123 = vrot.slane %v1122, 4
      %v1125 = vshll.u32 %v1040, 16
      %v1127 = vrot.slane %v1125, 5
      %v1128 = vsel %vm486, %v1123, %v1127
      %v1130 = vshrl.u32 %v1041, 16
      %v1132 = vrot.slane %v1130, 4
      %v1133 = vshll.u32 %v1041, 16
      %v1135 = vrot.slane %v1133, 5
      %v1136 = vor.u32 %v1132, %v1135
      %v1137 = vrot.slane %v1136, 4
      %v1139 = vshll.u32 %v1042, 16
      %v1141 = vrot.slane %v1139, 5
      %v1142 = vsel %vm486, %v1137, %v1141
      %v1144 = vshrl.u32 %v1043, 16
      %v1146 = vrot.slane %v1144, 4
      %v1147 = vshll.u32 %v1043, 16
      %v1149 = vrot.slane %v1147, 5
      %v1150 = vor.u32 %v1146, %v1149
      %v1151 = vrot.slane %v1150, 4
      %v1153 = vshll.u32 %v1044, 16
      %v1155 = vrot.slane %v1153, 5
      %v1156 = vsel %vm486, %v1151, %v1155
      %s1157 = scalar_lea.vmem %s1, 256
      %v1158 = vld [vmem:[%s1157] sm:$0xf]
      %v1159 = vld [vmem:[%s1157 + $0x4] sm:$0xf]
      %v1160 = vld [vmem:[%s1157 + $0x8] sm:$0xf]
      %v1161 = vld [vmem:[%s1157 + $0xc] sm:$0xf]
      %v1162 = vld [vmem:[%s1157 + $0x10] sm:$0xf]
      %v1163 = vld [vmem:[%s1157 + $0x14] sm:$0xf]
      %v1164 = vld [vmem:[%s1157 + $0x18] sm:$0xf]
      %v1165 = vld [vmem:[%s1157 + $0x1c] sm:$0xf]
      %v1166 = vld [vmem:[%s1157 + $0x20] sm:$0xf]
      %v1167 = vld [vmem:[%s1157 + $0x24] sm:$0xf]
      %v1168 = vld [vmem:[%s1157 + $0x28] sm:$0xf]
      %v1169 = vld [vmem:[%s1157 + $0x2c] sm:$0xf]
      %v1170 = vld [vmem:[%s1157 + $0x30] sm:$0xf]
      %v1171 = vld [vmem:[%s1157 + $0x34] sm:$0xf]
      %v1172 = vld [vmem:[%s1157 + $0x38] sm:$0xf]
      %v1173 = vld [vmem:[%s1157 + $0x3c] sm:$0xf]
      %v1174 = vunpack.c.l.b16 %v1058
      %v1175 = vunpack.c.l.b16 %v1072
      %v1176 = vunpack.c.l.b16 %v1086
      %v1177 = vunpack.c.l.b16 %v1100
      %v1178 = vunpack.c.l.b16 %v1114
      %v1179 = vunpack.c.l.b16 %v1128
      %v1180 = vunpack.c.l.b16 %v1142
      %v1181 = vunpack.c.l.b16 %v1156
      %v1182 = vpack.c.b16 %v1175, %v1174
      %v1183 = vpack.c.b16 %v1177, %v1176
      %v1184 = vpack.c.b16 %v1179, %v1178
      %v1185 = vpack.c.b16 %v1181, %v1180
      %v1206 = vunpack.c.l.b16 %v1158
      %v1207 = vunpack.c.l.b16 %v1159
      %v1208 = vunpack.c.l.b16 %v1160
      %v1209 = vunpack.c.l.b16 %v1161
      %v1210 = vunpack.c.l.b16 %v1162
      %v1211 = vunpack.c.l.b16 %v1163
      %v1212 = vunpack.c.l.b16 %v1164
      %v1213 = vunpack.c.l.b16 %v1165
      %v1214 = vunpack.c.l.b16 %v1166
      %v1215 = vunpack.c.l.b16 %v1167
      %v1216 = vunpack.c.l.b16 %v1168
      %v1217 = vunpack.c.l.b16 %v1169
      %v1218 = vunpack.c.l.b16 %v1170
      %v1219 = vunpack.c.l.b16 %v1171
      %v1220 = vunpack.c.l.b16 %v1172
      %v1221 = vunpack.c.l.b16 %v1173
      %v1222 = vpack.c.b16 %v1207, %v1206
      %v1223 = vpack.c.b16 %v1209, %v1208
      %v1224 = vpack.c.b16 %v1211, %v1210
      %v1225 = vpack.c.b16 %v1213, %v1212
      %v1226 = vpack.c.b16 %v1215, %v1214
      %v1227 = vpack.c.b16 %v1217, %v1216
      %v1228 = vpack.c.b16 %v1219, %v1218
      %v1229 = vpack.c.b16 %v1221, %v1220
      %1238 = vmatpush.bf16.msra.mxu0 %v1229
      %1239 = vmatpush.bf16.msra.mxu0 %v1228
      %1240 = vmatpush.bf16.msra.mxu0 %v1227
      %1241 = vmatpush.bf16.msra.mxu0 %v1226
      %1242 = vmatpush.bf16.msra.mxu0 %v1225
      %1243 = vmatpush.bf16.msra.mxu0 %v1224
      %1244 = vmatpush.bf16.msra.mxu0 %v1223
      %1245 = vmatpush.bf16.msra.mxu0 %v1222
      %1246 = vmatmul.bf16.gmra.mxu0 %v1182
      %v1247 = vpop.f32.mrf.mxu0
      %v1248 = vadd.f32 0.0, %v1247
      %v1249 = vpop.f32.mrf.mxu0
      %v1250 = vadd.f32 0.0, %v1249
      %1251 = vmatmul.bf16.gmra.mxu0 %v1183
      %v1252 = vpop.f32.mrf.mxu0
      %v1253 = vadd.f32 0.0, %v1252
      %v1254 = vpop.f32.mrf.mxu0
      %v1255 = vadd.f32 0.0, %v1254
      %1256 = vmatmul.bf16.gmra.mxu0 %v1184
      %v1257 = vpop.f32.mrf.mxu0
      %v1258 = vadd.f32 0.0, %v1257
      %v1259 = vpop.f32.mrf.mxu0
      %v1260 = vadd.f32 0.0, %v1259
      %1261 = vmatmul.bf16.gmra.mxu0 %v1185
      %v1262 = vpop.f32.mrf.mxu0
      %v1263 = vadd.f32 0.0, %v1262
      %v1264 = vpop.f32.mrf.mxu0
      %v1265 = vadd.f32 0.0, %v1264
      %1266 = vdwg.mxu0
      %v1267 = vadd.f32 %v1021, %v1248
      %v1268 = vadd.f32 %v1022, %v1250
      %v1269 = vadd.f32 %v1023, %v1253
      %v1270 = vadd.f32 %v1024, %v1255
      %v1271 = vadd.f32 %v1025, %v1258
      %v1272 = vadd.f32 %v1026, %v1260
      %v1273 = vadd.f32 %v1027, %v1263
      %v1274 = vadd.f32 %v1028, %v1265
      %v1275 = vld [vmem:[%s894] sm:$0xe]
      %v1276 = vld [vmem:[%s894 + $0x8] sm:$0xe]
      %v1277 = vld [vmem:[%s894 + $0x10] sm:$0xe]
      %v1278 = vld [vmem:[%s894 + $0x18] sm:$0xe]
      %v1279 = vld [vmem:[%s894 + $0x20] sm:$0xe]
      %v1280 = vld [vmem:[%s894 + $0x28] sm:$0xe]
      %v1281 = vld [vmem:[%s894 + $0x30] sm:$0xe]
      %v1282 = vld [vmem:[%s894 + $0x38] sm:$0xe]
      %v1299 = vrot.slane %v1275, 5
      %v1300 = vrot.slane %v1299, 4
      %v1301 = vrot.slane %v1030, 5
      %v1302 = vsel %vm743, %v1300, %v1301
      %v1303 = vrot.slane %v1276, 5
      %v1304 = vrot.slane %v1303, 4
      %v1305 = vrot.slane %v1032, 5
      %v1306 = vsel %vm743, %v1304, %v1305
      %v1307 = vrot.slane %v1277, 5
      %v1308 = vrot.slane %v1307, 4
      %v1309 = vrot.slane %v1034, 5
      %v1310 = vsel %vm743, %v1308, %v1309
      %v1311 = vrot.slane %v1278, 5
      %v1312 = vrot.slane %v1311, 4
      %v1313 = vrot.slane %v1036, 5
      %v1314 = vsel %vm743, %v1312, %v1313
      %v1315 = vrot.slane %v1279, 5
      %v1316 = vrot.slane %v1315, 4
      %v1317 = vrot.slane %v1038, 5
      %v1318 = vsel %vm743, %v1316, %v1317
      %v1319 = vrot.slane %v1280, 5
      %v1320 = vrot.slane %v1319, 4
      %v1321 = vrot.slane %v1040, 5
      %v1322 = vsel %vm743, %v1320, %v1321
      %v1323 = vrot.slane %v1281, 5
      %v1324 = vrot.slane %v1323, 4
      %v1325 = vrot.slane %v1042, 5
      %v1326 = vsel %vm743, %v1324, %v1325
      %v1327 = vrot.slane %v1282, 5
      %v1328 = vrot.slane %v1327, 4
      %v1329 = vrot.slane %v1044, 5
      %v1330 = vsel %vm743, %v1328, %v1329
      %s1331 = scalar_lea.vmem %s1, 320
      %v1332 = vld [vmem:[%s1331] sm:$0xf]
      %v1333 = vld [vmem:[%s1331 + $0x4] sm:$0xf]
      %v1334 = vld [vmem:[%s1331 + $0x8] sm:$0xf]
      %v1335 = vld [vmem:[%s1331 + $0xc] sm:$0xf]
      %v1336 = vld [vmem:[%s1331 + $0x10] sm:$0xf]
      %v1337 = vld [vmem:[%s1331 + $0x14] sm:$0xf]
      %v1338 = vld [vmem:[%s1331 + $0x18] sm:$0xf]
      %v1339 = vld [vmem:[%s1331 + $0x1c] sm:$0xf]
      %v1340 = vld [vmem:[%s1331 + $0x20] sm:$0xf]
      %v1341 = vld [vmem:[%s1331 + $0x24] sm:$0xf]
      %v1342 = vld [vmem:[%s1331 + $0x28] sm:$0xf]
      %v1343 = vld [vmem:[%s1331 + $0x2c] sm:$0xf]
      %v1344 = vld [vmem:[%s1331 + $0x30] sm:$0xf]
      %v1345 = vld [vmem:[%s1331 + $0x34] sm:$0xf]
      %v1346 = vld [vmem:[%s1331 + $0x38] sm:$0xf]
      %v1347 = vld [vmem:[%s1331 + $0x3c] sm:$0xf]
      %v1348 = vunpack.c.l.b16 %v1302
      %v1349 = vunpack.c.l.b16 %v1306
      %v1350 = vunpack.c.l.b16 %v1310
      %v1351 = vunpack.c.l.b16 %v1314
      %v1352 = vunpack.c.l.b16 %v1318
      %v1353 = vunpack.c.l.b16 %v1322
      %v1354 = vunpack.c.l.b16 %v1326
      %v1355 = vunpack.c.l.b16 %v1330
      %v1356 = vpack.c.b16 %v1349, %v1348
      %v1357 = vpack.c.b16 %v1351, %v1350
      %v1358 = vpack.c.b16 %v1353, %v1352
      %v1359 = vpack.c.b16 %v1355, %v1354
      %v1380 = vunpack.c.l.b16 %v1332
      %v1381 = vunpack.c.l.b16 %v1333
      %v1382 = vunpack.c.l.b16 %v1334
      %v1383 = vunpack.c.l.b16 %v1335
      %v1384 = vunpack.c.l.b16 %v1336
      %v1385 = vunpack.c.l.b16 %v1337
      %v1386 = vunpack.c.l.b16 %v1338
      %v1387 = vunpack.c.l.b16 %v1339
      %v1388 = vunpack.c.l.b16 %v1340
      %v1389 = vunpack.c.l.b16 %v1341
      %v1390 = vunpack.c.l.b16 %v1342
      %v1391 = vunpack.c.l.b16 %v1343
      %v1392 = vunpack.c.l.b16 %v1344
      %v1393 = vunpack.c.l.b16 %v1345
      %v1394 = vunpack.c.l.b16 %v1346
      %v1395 = vunpack.c.l.b16 %v1347
      %v1396 = vpack.c.b16 %v1381, %v1380
      %v1397 = vpack.c.b16 %v1383, %v1382
      %v1398 = vpack.c.b16 %v1385, %v1384
      %v1399 = vpack.c.b16 %v1387, %v1386
      %v1400 = vpack.c.b16 %v1389, %v1388
      %v1401 = vpack.c.b16 %v1391, %v1390
      %v1402 = vpack.c.b16 %v1393, %v1392
      %v1403 = vpack.c.b16 %v1395, %v1394
      %1412 = vmatpush.bf16.msra.mxu0 %v1403
      %1413 = vmatpush.bf16.msra.mxu0 %v1402
      %1414 = vmatpush.bf16.msra.mxu0 %v1401
      %1415 = vmatpush.bf16.msra.mxu0 %v1400
      %1416 = vmatpush.bf16.msra.mxu0 %v1399
      %1417 = vmatpush.bf16.msra.mxu0 %v1398
      %1418 = vmatpush.bf16.msra.mxu0 %v1397
      %1419 = vmatpush.bf16.msra.mxu0 %v1396
      %1420 = vmatmul.bf16.gmra.mxu0 %v1356
      %v1421 = vpop.f32.mrf.mxu0
      %v1422 = vadd.f32 0.0, %v1421
      %v1423 = vpop.f32.mrf.mxu0
      %v1424 = vadd.f32 0.0, %v1423
      %1425 = vmatmul.bf16.gmra.mxu0 %v1357
      %v1426 = vpop.f32.mrf.mxu0
      %v1427 = vadd.f32 0.0, %v1426
      %v1428 = vpop.f32.mrf.mxu0
      %v1429 = vadd.f32 0.0, %v1428
      %1430 = vmatmul.bf16.gmra.mxu0 %v1358
      %v1431 = vpop.f32.mrf.mxu0
      %v1432 = vadd.f32 0.0, %v1431
      %v1433 = vpop.f32.mrf.mxu0
      %v1434 = vadd.f32 0.0, %v1433
      %1435 = vmatmul.bf16.gmra.mxu0 %v1359
      %v1436 = vpop.f32.mrf.mxu0
      %v1437 = vadd.f32 0.0, %v1436
      %v1438 = vpop.f32.mrf.mxu0
      %v1439 = vadd.f32 0.0, %v1438
      %1440 = vdwg.mxu0
      %v1441 = vadd.f32 %v1267, %v1422
      %v1442 = vadd.f32 %v1268, %v1424
      %v1443 = vadd.f32 %v1269, %v1427
      %v1444 = vadd.f32 %v1270, %v1429
      %v1445 = vadd.f32 %v1271, %v1432
      %v1446 = vadd.f32 %v1272, %v1434
      %v1447 = vadd.f32 %v1273, %v1437
      %v1448 = vadd.f32 %v1274, %v1439
      %s1449 = scalar_lea.vmem %s207, 16
      %v1450 = vld [vmem:[%s1449] sm:$0xf]
      %v1451 = vld [vmem:[%s1449 + $0x8] sm:$0xf]
      %v1452 = vld [vmem:[%s1449 + $0x10] sm:$0xf]
      %v1453 = vld [vmem:[%s1449 + $0x18] sm:$0xf]
      %v1454 = vld [vmem:[%s1449 + $0x20] sm:$0xf]
      %v1455 = vld [vmem:[%s1449 + $0x28] sm:$0xf]
      %v1456 = vld [vmem:[%s1449 + $0x30] sm:$0xf]
      %v1457 = vld [vmem:[%s1449 + $0x38] sm:$0xf]
      %s1458 = scalar_lea.vmem %s1, 384
      %v1459 = vld [vmem:[%s1458] sm:$0xf]
      %v1460 = vld [vmem:[%s1458 + $0x4] sm:$0xf]
      %v1461 = vld [vmem:[%s1458 + $0x8] sm:$0xf]
      %v1462 = vld [vmem:[%s1458 + $0xc] sm:$0xf]
      %v1463 = vld [vmem:[%s1458 + $0x10] sm:$0xf]
      %v1464 = vld [vmem:[%s1458 + $0x14] sm:$0xf]
      %v1465 = vld [vmem:[%s1458 + $0x18] sm:$0xf]
      %v1466 = vld [vmem:[%s1458 + $0x1c] sm:$0xf]
      %v1467 = vld [vmem:[%s1458 + $0x20] sm:$0xf]
      %v1468 = vld [vmem:[%s1458 + $0x24] sm:$0xf]
      %v1469 = vld [vmem:[%s1458 + $0x28] sm:$0xf]
      %v1470 = vld [vmem:[%s1458 + $0x2c] sm:$0xf]
      %v1471 = vld [vmem:[%s1458 + $0x30] sm:$0xf]
      %v1472 = vld [vmem:[%s1458 + $0x34] sm:$0xf]
      %v1473 = vld [vmem:[%s1458 + $0x38] sm:$0xf]
      %v1474 = vld [vmem:[%s1458 + $0x3c] sm:$0xf]
      %v1483 = vunpack.c.l.b16 %v1450
      %v1484 = vunpack.c.l.b16 %v1451
      %v1485 = vunpack.c.l.b16 %v1452
      %v1486 = vunpack.c.l.b16 %v1453
      %v1487 = vunpack.c.l.b16 %v1454
      %v1488 = vunpack.c.l.b16 %v1455
      %v1489 = vunpack.c.l.b16 %v1456
      %v1490 = vunpack.c.l.b16 %v1457
      %v1491 = vpack.c.b16 %v1484, %v1483
      %v1492 = vpack.c.b16 %v1486, %v1485
      %v1493 = vpack.c.b16 %v1488, %v1487
      %v1494 = vpack.c.b16 %v1490, %v1489
      %v1515 = vunpack.c.l.b16 %v1459
      %v1516 = vunpack.c.l.b16 %v1460
      %v1517 = vunpack.c.l.b16 %v1461
      %v1518 = vunpack.c.l.b16 %v1462
      %v1519 = vunpack.c.l.b16 %v1463
      %v1520 = vunpack.c.l.b16 %v1464
      %v1521 = vunpack.c.l.b16 %v1465
      %v1522 = vunpack.c.l.b16 %v1466
      %v1523 = vunpack.c.l.b16 %v1467
      %v1524 = vunpack.c.l.b16 %v1468
      %v1525 = vunpack.c.l.b16 %v1469
      %v1526 = vunpack.c.l.b16 %v1470
      %v1527 = vunpack.c.l.b16 %v1471
      %v1528 = vunpack.c.l.b16 %v1472
      %v1529 = vunpack.c.l.b16 %v1473
      %v1530 = vunpack.c.l.b16 %v1474
      %v1531 = vpack.c.b16 %v1516, %v1515
      %v1532 = vpack.c.b16 %v1518, %v1517
      %v1533 = vpack.c.b16 %v1520, %v1519
      %v1534 = vpack.c.b16 %v1522, %v1521
      %v1535 = vpack.c.b16 %v1524, %v1523
      %v1536 = vpack.c.b16 %v1526, %v1525
      %v1537 = vpack.c.b16 %v1528, %v1527
      %v1538 = vpack.c.b16 %v1530, %v1529
      %1547 = vmatpush.bf16.msra.mxu0 %v1538
      %1548 = vmatpush.bf16.msra.mxu0 %v1537
      %1549 = vmatpush.bf16.msra.mxu0 %v1536
      %1550 = vmatpush.bf16.msra.mxu0 %v1535
      %1551 = vmatpush.bf16.msra.mxu0 %v1534
      %1552 = vmatpush.bf16.msra.mxu0 %v1533
      %1553 = vmatpush.bf16.msra.mxu0 %v1532
      %1554 = vmatpush.bf16.msra.mxu0 %v1531
      %1555 = vmatmul.bf16.gmra.mxu0 %v1491
      %v1556 = vpop.f32.mrf.mxu0
      %v1557 = vadd.f32 0.0, %v1556
      %v1558 = vpop.f32.mrf.mxu0
      %v1559 = vadd.f32 0.0, %v1558
      %1560 = vmatmul.bf16.gmra.mxu0 %v1492
      %v1561 = vpop.f32.mrf.mxu0
      %v1562 = vadd.f32 0.0, %v1561
      %v1563 = vpop.f32.mrf.mxu0
      %v1564 = vadd.f32 0.0, %v1563
      %1565 = vmatmul.bf16.gmra.mxu0 %v1493
      %v1566 = vpop.f32.mrf.mxu0
      %v1567 = vadd.f32 0.0, %v1566
      %v1568 = vpop.f32.mrf.mxu0
      %v1569 = vadd.f32 0.0, %v1568
      %1570 = vmatmul.bf16.gmra.mxu0 %v1494
      %v1571 = vpop.f32.mrf.mxu0
      %v1572 = vadd.f32 0.0, %v1571
      %v1573 = vpop.f32.mrf.mxu0
      %v1574 = vadd.f32 0.0, %v1573
      %1575 = vdwg.mxu0
      %v1576 = vadd.f32 %v1441, %v1557
      %v1577 = vadd.f32 %v1442, %v1559
      %v1578 = vadd.f32 %v1443, %v1562
      %v1579 = vadd.f32 %v1444, %v1564
      %v1580 = vadd.f32 %v1445, %v1567
      %v1581 = vadd.f32 %v1446, %v1569
      %v1582 = vadd.f32 %v1447, %v1572
      %v1583 = vadd.f32 %v1448, %v1574
      %v1584 = vld [vmem:[%s1449] sm:$0xf]
      %v1585 = vld [vmem:[%s1449 + $0x4] sm:$0x1]
      %v1586 = vld [vmem:[%s1449 + $0x8] sm:$0xf]
      %v1587 = vld [vmem:[%s1449 + $0xc] sm:$0x1]
      %v1588 = vld [vmem:[%s1449 + $0x10] sm:$0xf]
      %v1589 = vld [vmem:[%s1449 + $0x14] sm:$0x1]
      %v1590 = vld [vmem:[%s1449 + $0x18] sm:$0xf]
      %v1591 = vld [vmem:[%s1449 + $0x1c] sm:$0x1]
      %v1592 = vld [vmem:[%s1449 + $0x20] sm:$0xf]
      %v1593 = vld [vmem:[%s1449 + $0x24] sm:$0x1]
      %v1594 = vld [vmem:[%s1449 + $0x28] sm:$0xf]
      %v1595 = vld [vmem:[%s1449 + $0x2c] sm:$0x1]
      %v1596 = vld [vmem:[%s1449 + $0x30] sm:$0xf]
      %v1597 = vld [vmem:[%s1449 + $0x34] sm:$0x1]
      %v1598 = vld [vmem:[%s1449 + $0x38] sm:$0xf]
      %v1599 = vld [vmem:[%s1449 + $0x3c] sm:$0x1]
      %v1601 = vshrl.u32 %v1584, 16
      %v1603 = vrot.slane %v1601, 4
      %v1604 = vshll.u32 %v1584, 16
      %v1606 = vrot.slane %v1604, 5
      %v1607 = vor.u32 %v1603, %v1606
      %v1608 = vrot.slane %v1607, 4
      %v1610 = vshll.u32 %v1585, 16
      %v1612 = vrot.slane %v1610, 5
      %v1613 = vsel %vm486, %v1608, %v1612
      %v1615 = vshrl.u32 %v1586, 16
      %v1617 = vrot.slane %v1615, 4
      %v1618 = vshll.u32 %v1586, 16
      %v1620 = vrot.slane %v1618, 5
      %v1621 = vor.u32 %v1617, %v1620
      %v1622 = vrot.slane %v1621, 4
      %v1624 = vshll.u32 %v1587, 16
      %v1626 = vrot.slane %v1624, 5
      %v1627 = vsel %vm486, %v1622, %v1626
      %v1629 = vshrl.u32 %v1588, 16
      %v1631 = vrot.slane %v1629, 4
      %v1632 = vshll.u32 %v1588, 16
      %v1634 = vrot.slane %v1632, 5
      %v1635 = vor.u32 %v1631, %v1634
      %v1636 = vrot.slane %v1635, 4
      %v1638 = vshll.u32 %v1589, 16
      %v1640 = vrot.slane %v1638, 5
      %v1641 = vsel %vm486, %v1636, %v1640
      %v1643 = vshrl.u32 %v1590, 16
      %v1645 = vrot.slane %v1643, 4
      %v1646 = vshll.u32 %v1590, 16
      %v1648 = vrot.slane %v1646, 5
      %v1649 = vor.u32 %v1645, %v1648
      %v1650 = vrot.slane %v1649, 4
      %v1652 = vshll.u32 %v1591, 16
      %v1654 = vrot.slane %v1652, 5
      %v1655 = vsel %vm486, %v1650, %v1654
      %v1657 = vshrl.u32 %v1592, 16
      %v1659 = vrot.slane %v1657, 4
      %v1660 = vshll.u32 %v1592, 16
      %v1662 = vrot.slane %v1660, 5
      %v1663 = vor.u32 %v1659, %v1662
      %v1664 = vrot.slane %v1663, 4
      %v1666 = vshll.u32 %v1593, 16
      %v1668 = vrot.slane %v1666, 5
      %v1669 = vsel %vm486, %v1664, %v1668
      %v1671 = vshrl.u32 %v1594, 16
      %v1673 = vrot.slane %v1671, 4
      %v1674 = vshll.u32 %v1594, 16
      %v1676 = vrot.slane %v1674, 5
      %v1677 = vor.u32 %v1673, %v1676
      %v1678 = vrot.slane %v1677, 4
      %v1680 = vshll.u32 %v1595, 16
      %v1682 = vrot.slane %v1680, 5
      %v1683 = vsel %vm486, %v1678, %v1682
      %v1685 = vshrl.u32 %v1596, 16
      %v1687 = vrot.slane %v1685, 4
      %v1688 = vshll.u32 %v1596, 16
      %v1690 = vrot.slane %v1688, 5
      %v1691 = vor.u32 %v1687, %v1690
      %v1692 = vrot.slane %v1691, 4
      %v1694 = vshll.u32 %v1597, 16
      %v1696 = vrot.slane %v1694, 5
      %v1697 = vsel %vm486, %v1692, %v1696
      %v1699 = vshrl.u32 %v1598, 16
      %v1701 = vrot.slane %v1699, 4
      %v1702 = vshll.u32 %v1598, 16
      %v1704 = vrot.slane %v1702, 5
      %v1705 = vor.u32 %v1701, %v1704
      %v1706 = vrot.slane %v1705, 4
      %v1708 = vshll.u32 %v1599, 16
      %v1710 = vrot.slane %v1708, 5
      %v1711 = vsel %vm486, %v1706, %v1710
      %s1712 = scalar_lea.vmem %s1, 448
      %v1713 = vld [vmem:[%s1712] sm:$0xf]
      %v1714 = vld [vmem:[%s1712 + $0x4] sm:$0xf]
      %v1715 = vld [vmem:[%s1712 + $0x8] sm:$0xf]
      %v1716 = vld [vmem:[%s1712 + $0xc] sm:$0xf]
      %v1717 = vld [vmem:[%s1712 + $0x10] sm:$0xf]
      %v1718 = vld [vmem:[%s1712 + $0x14] sm:$0xf]
      %v1719 = vld [vmem:[%s1712 + $0x18] sm:$0xf]
      %v1720 = vld [vmem:[%s1712 + $0x1c] sm:$0xf]
      %v1721 = vld [vmem:[%s1712 + $0x20] sm:$0xf]
      %v1722 = vld [vmem:[%s1712 + $0x24] sm:$0xf]
      %v1723 = vld [vmem:[%s1712 + $0x28] sm:$0xf]
      %v1724 = vld [vmem:[%s1712 + $0x2c] sm:$0xf]
      %v1725 = vld [vmem:[%s1712 + $0x30] sm:$0xf]
      %v1726 = vld [vmem:[%s1712 + $0x34] sm:$0xf]
      %v1727 = vld [vmem:[%s1712 + $0x38] sm:$0xf]
      %v1728 = vld [vmem:[%s1712 + $0x3c] sm:$0xf]
      %v1729 = vunpack.c.l.b16 %v1613
      %v1730 = vunpack.c.l.b16 %v1627
      %v1731 = vunpack.c.l.b16 %v1641
      %v1732 = vunpack.c.l.b16 %v1655
      %v1733 = vunpack.c.l.b16 %v1669
      %v1734 = vunpack.c.l.b16 %v1683
      %v1735 = vunpack.c.l.b16 %v1697
      %v1736 = vunpack.c.l.b16 %v1711
      %v1737 = vpack.c.b16 %v1730, %v1729
      %v1738 = vpack.c.b16 %v1732, %v1731
      %v1739 = vpack.c.b16 %v1734, %v1733
      %v1740 = vpack.c.b16 %v1736, %v1735
      %v1761 = vunpack.c.l.b16 %v1713
      %v1762 = vunpack.c.l.b16 %v1714
      %v1763 = vunpack.c.l.b16 %v1715
      %v1764 = vunpack.c.l.b16 %v1716
      %v1765 = vunpack.c.l.b16 %v1717
      %v1766 = vunpack.c.l.b16 %v1718
      %v1767 = vunpack.c.l.b16 %v1719
      %v1768 = vunpack.c.l.b16 %v1720
      %v1769 = vunpack.c.l.b16 %v1721
      %v1770 = vunpack.c.l.b16 %v1722
      %v1771 = vunpack.c.l.b16 %v1723
      %v1772 = vunpack.c.l.b16 %v1724
      %v1773 = vunpack.c.l.b16 %v1725
      %v1774 = vunpack.c.l.b16 %v1726
      %v1775 = vunpack.c.l.b16 %v1727
      %v1776 = vunpack.c.l.b16 %v1728
      %v1777 = vpack.c.b16 %v1762, %v1761
      %v1778 = vpack.c.b16 %v1764, %v1763
      %v1779 = vpack.c.b16 %v1766, %v1765
      %v1780 = vpack.c.b16 %v1768, %v1767
      %v1781 = vpack.c.b16 %v1770, %v1769
      %v1782 = vpack.c.b16 %v1772, %v1771
      %v1783 = vpack.c.b16 %v1774, %v1773
      %v1784 = vpack.c.b16 %v1776, %v1775
      %1793 = vmatpush.bf16.msra.mxu0 %v1784
      %1794 = vmatpush.bf16.msra.mxu0 %v1783
      %1795 = vmatpush.bf16.msra.mxu0 %v1782
      %1796 = vmatpush.bf16.msra.mxu0 %v1781
      %1797 = vmatpush.bf16.msra.mxu0 %v1780
      %1798 = vmatpush.bf16.msra.mxu0 %v1779
      %1799 = vmatpush.bf16.msra.mxu0 %v1778
      %1800 = vmatpush.bf16.msra.mxu0 %v1777
      %1801 = vmatmul.bf16.gmra.mxu0 %v1737
      %v1802 = vpop.f32.mrf.mxu0
      %v1803 = vadd.f32 0.0, %v1802
      %v1804 = vpop.f32.mrf.mxu0
      %v1805 = vadd.f32 0.0, %v1804
      %1806 = vmatmul.bf16.gmra.mxu0 %v1738
      %v1807 = vpop.f32.mrf.mxu0
      %v1808 = vadd.f32 0.0, %v1807
      %v1809 = vpop.f32.mrf.mxu0
      %v1810 = vadd.f32 0.0, %v1809
      %1811 = vmatmul.bf16.gmra.mxu0 %v1739
      %v1812 = vpop.f32.mrf.mxu0
      %v1813 = vadd.f32 0.0, %v1812
      %v1814 = vpop.f32.mrf.mxu0
      %v1815 = vadd.f32 0.0, %v1814
      %1816 = vmatmul.bf16.gmra.mxu0 %v1740
      %v1817 = vpop.f32.mrf.mxu0
      %v1818 = vadd.f32 0.0, %v1817
      %v1819 = vpop.f32.mrf.mxu0
      %v1820 = vadd.f32 0.0, %v1819
      %1821 = vdwg.mxu0
      %v1822 = vadd.f32 %v1576, %v1803
      %v1823 = vadd.f32 %v1577, %v1805
      %v1824 = vadd.f32 %v1578, %v1808
      %v1825 = vadd.f32 %v1579, %v1810
      %v1826 = vadd.f32 %v1580, %v1813
      %v1827 = vadd.f32 %v1581, %v1815
      %v1828 = vadd.f32 %v1582, %v1818
      %v1829 = vadd.f32 %v1583, %v1820
      %v1830 = vld [vmem:[%s1449] sm:$0xe]
      %v1831 = vld [vmem:[%s1449 + $0x8] sm:$0xe]
      %v1832 = vld [vmem:[%s1449 + $0x10] sm:$0xe]
      %v1833 = vld [vmem:[%s1449 + $0x18] sm:$0xe]
      %v1834 = vld [vmem:[%s1449 + $0x20] sm:$0xe]
      %v1835 = vld [vmem:[%s1449 + $0x28] sm:$0xe]
      %v1836 = vld [vmem:[%s1449 + $0x30] sm:$0xe]
      %v1837 = vld [vmem:[%s1449 + $0x38] sm:$0xe]
      %v1854 = vrot.slane %v1830, 5
      %v1855 = vrot.slane %v1854, 4
      %v1856 = vrot.slane %v1585, 5
      %v1857 = vsel %vm743, %v1855, %v1856
      %v1858 = vrot.slane %v1831, 5
      %v1859 = vrot.slane %v1858, 4
      %v1860 = vrot.slane %v1587, 5
      %v1861 = vsel %vm743, %v1859, %v1860
      %v1862 = vrot.slane %v1832, 5
      %v1863 = vrot.slane %v1862, 4
      %v1864 = vrot.slane %v1589, 5
      %v1865 = vsel %vm743, %v1863, %v1864
      %v1866 = vrot.slane %v1833, 5
      %v1867 = vrot.slane %v1866, 4
      %v1868 = vrot.slane %v1591, 5
      %v1869 = vsel %vm743, %v1867, %v1868
      %v1870 = vrot.slane %v1834, 5
      %v1871 = vrot.slane %v1870, 4
      %v1872 = vrot.slane %v1593, 5
      %v1873 = vsel %vm743, %v1871, %v1872
      %v1874 = vrot.slane %v1835, 5
      %v1875 = vrot.slane %v1874, 4
      %v1876 = vrot.slane %v1595, 5
      %v1877 = vsel %vm743, %v1875, %v1876
      %v1878 = vrot.slane %v1836, 5
      %v1879 = vrot.slane %v1878, 4
      %v1880 = vrot.slane %v1597, 5
      %v1881 = vsel %vm743, %v1879, %v1880
      %v1882 = vrot.slane %v1837, 5
      %v1883 = vrot.slane %v1882, 4
      %v1884 = vrot.slane %v1599, 5
      %v1885 = vsel %vm743, %v1883, %v1884
      %s1886 = scalar_lea.vmem %s1, 512
      %v1887 = vld [vmem:[%s1886] sm:$0xf]
      %v1888 = vld [vmem:[%s1886 + $0x4] sm:$0xf]
      %v1889 = vld [vmem:[%s1886 + $0x8] sm:$0xf]
      %v1890 = vld [vmem:[%s1886 + $0xc] sm:$0xf]
      %v1891 = vld [vmem:[%s1886 + $0x10] sm:$0xf]
      %v1892 = vld [vmem:[%s1886 + $0x14] sm:$0xf]
      %v1893 = vld [vmem:[%s1886 + $0x18] sm:$0xf]
      %v1894 = vld [vmem:[%s1886 + $0x1c] sm:$0xf]
      %v1895 = vld [vmem:[%s1886 + $0x20] sm:$0xf]
      %v1896 = vld [vmem:[%s1886 + $0x24] sm:$0xf]
      %v1897 = vld [vmem:[%s1886 + $0x28] sm:$0xf]
      %v1898 = vld [vmem:[%s1886 + $0x2c] sm:$0xf]
      %v1899 = vld [vmem:[%s1886 + $0x30] sm:$0xf]
      %v1900 = vld [vmem:[%s1886 + $0x34] sm:$0xf]
      %v1901 = vld [vmem:[%s1886 + $0x38] sm:$0xf]
      %v1902 = vld [vmem:[%s1886 + $0x3c] sm:$0xf]
      %v1903 = vunpack.c.l.b16 %v1857
      %v1904 = vunpack.c.l.b16 %v1861
      %v1905 = vunpack.c.l.b16 %v1865
      %v1906 = vunpack.c.l.b16 %v1869
      %v1907 = vunpack.c.l.b16 %v1873
      %v1908 = vunpack.c.l.b16 %v1877
      %v1909 = vunpack.c.l.b16 %v1881
      %v1910 = vunpack.c.l.b16 %v1885
      %v1911 = vpack.c.b16 %v1904, %v1903
      %v1912 = vpack.c.b16 %v1906, %v1905
      %v1913 = vpack.c.b16 %v1908, %v1907
      %v1914 = vpack.c.b16 %v1910, %v1909
      %v1935 = vunpack.c.l.b16 %v1887
      %v1936 = vunpack.c.l.b16 %v1888
      %v1937 = vunpack.c.l.b16 %v1889
      %v1938 = vunpack.c.l.b16 %v1890
      %v1939 = vunpack.c.l.b16 %v1891
      %v1940 = vunpack.c.l.b16 %v1892
      %v1941 = vunpack.c.l.b16 %v1893
      %v1942 = vunpack.c.l.b16 %v1894
      %v1943 = vunpack.c.l.b16 %v1895
      %v1944 = vunpack.c.l.b16 %v1896
      %v1945 = vunpack.c.l.b16 %v1897
      %v1946 = vunpack.c.l.b16 %v1898
      %v1947 = vunpack.c.l.b16 %v1899
      %v1948 = vunpack.c.l.b16 %v1900
      %v1949 = vunpack.c.l.b16 %v1901
      %v1950 = vunpack.c.l.b16 %v1902
      %v1951 = vpack.c.b16 %v1936, %v1935
      %v1952 = vpack.c.b16 %v1938, %v1937
      %v1953 = vpack.c.b16 %v1940, %v1939
      %v1954 = vpack.c.b16 %v1942, %v1941
      %v1955 = vpack.c.b16 %v1944, %v1943
      %v1956 = vpack.c.b16 %v1946, %v1945
      %v1957 = vpack.c.b16 %v1948, %v1947
      %v1958 = vpack.c.b16 %v1950, %v1949
      %1967 = vmatpush.bf16.msra.mxu0 %v1958
      %1968 = vmatpush.bf16.msra.mxu0 %v1957
      %1969 = vmatpush.bf16.msra.mxu0 %v1956
      %1970 = vmatpush.bf16.msra.mxu0 %v1955
      %1971 = vmatpush.bf16.msra.mxu0 %v1954
      %1972 = vmatpush.bf16.msra.mxu0 %v1953
      %1973 = vmatpush.bf16.msra.mxu0 %v1952
      %1974 = vmatpush.bf16.msra.mxu0 %v1951
      %1975 = vmatmul.bf16.gmra.mxu0 %v1911
      %v1976 = vpop.f32.mrf.mxu0
      %v1977 = vadd.f32 0.0, %v1976
      %v1978 = vpop.f32.mrf.mxu0
      %v1979 = vadd.f32 0.0, %v1978
      %1980 = vmatmul.bf16.gmra.mxu0 %v1912
      %v1981 = vpop.f32.mrf.mxu0
      %v1982 = vadd.f32 0.0, %v1981
      %v1983 = vpop.f32.mrf.mxu0
      %v1984 = vadd.f32 0.0, %v1983
      %1985 = vmatmul.bf16.gmra.mxu0 %v1913
      %v1986 = vpop.f32.mrf.mxu0
      %v1987 = vadd.f32 0.0, %v1986
      %v1988 = vpop.f32.mrf.mxu0
      %v1989 = vadd.f32 0.0, %v1988
      %1990 = vmatmul.bf16.gmra.mxu0 %v1914
      %v1991 = vpop.f32.mrf.mxu0
      %v1992 = vadd.f32 0.0, %v1991
      %v1993 = vpop.f32.mrf.mxu0
      %v1994 = vadd.f32 0.0, %v1993
      %1995 = vdwg.mxu0
      %v1996 = vadd.f32 %v1822, %v1977
      %v1997 = vadd.f32 %v1823, %v1979
      %v1998 = vadd.f32 %v1824, %v1982
      %v1999 = vadd.f32 %v1825, %v1984
      %v2000 = vadd.f32 %v1826, %v1987
      %v2001 = vadd.f32 %v1827, %v1989
      %v2002 = vadd.f32 %v1828, %v1992
      %v2003 = vadd.f32 %v1829, %v1994
      %2004 = vst [vmem:[%s217] sm:$0xff] %v1996
      %2005 = vst [vmem:[%s217 + $0x8] sm:$0xff] %v1997
      %2006 = vst [vmem:[%s217 + $0x10] sm:$0xff] %v1998
      %2007 = vst [vmem:[%s217 + $0x18] sm:$0xff] %v1999
      %2008 = vst [vmem:[%s217 + $0x20] sm:$0xff] %v2000
      %2009 = vst [vmem:[%s217 + $0x28] sm:$0xff] %v2001
      %2010 = vst [vmem:[%s217 + $0x30] sm:$0xff] %v2002
      %2011 = vst [vmem:[%s217 + $0x38] sm:$0xff] %v2003
      %p2012 = scmp.lt.s32.totalorder %s15, 1
      %s2013 = scalar_select %p2012, %s15, 1
      %s2014 = smul.addr %s2013, 8
      %s2015 = smul.addr %s2014, 8
      %s2016 = scalar_lea.vmem %s4, %s2015
      // Predicated region
      $region37: #{basic_block_forward.3} parent=35 // pred_check
        %p2017 = pneg %p127
      $region38: #{basic_block_forward.3} parent=35 // pred_check_branch
        %2019 = sbr.rel (%p2017) target = $region40
      $region39: #{basic_block_forward.3} parent=35 // pred_region
        _
      $region40: #{basic_block_forward.3} parent=35 // pred_fallthru
        _
    $region36: #{basic_block_forward.3} parent=5 // pred_fallthru
      _
    %p2020 = scmp.le.s32.totalorder 2, %s10
    // Predicated region
    $region41: #{basic_block_forward.3} parent=5 // pred_check
      %p2021 = pneg %p2020
    $region42: #{basic_block_forward.3} parent=5 // pred_check_branch
      %2023 = sbr.rel (%p2021) target = $region44
    $region43: #{basic_block_forward.3} parent=5 // pred_region
      %s2024 = ssub.s32 %s10, 2
      // Predicated region
      $region45: #{basic_block_forward.3} parent=43 // pred_check
        %p2025 = pneg %p133
      $region46: #{basic_block_forward.3} parent=43 // pred_check_branch
        %2027 = sbr.rel (%p2025) target = $region48
      $region47: #{basic_block_forward.3} parent=43 // pred_region
        %p2028 = scmp.lt.s32.totalorder %s16, 1
        %s2029 = scalar_select %p2028, %s16, 1
        %s2030 = smul.addr %s2029, 8
        %s2031 = smul.addr %s2030, 8
        %s2032 = scalar_lea.vmem %s4, %s2031
      $region48: #{basic_block_forward.3} parent=43 // pred_fallthru
        _
    $region44: #{basic_block_forward.3} parent=5 // pred_fallthru
      _
  $region6: #{basic_block_forward.3} parent=0 // loop_footer
    %s14 = sadd.s32 1, %s10
  $region7: #{basic_block_forward.3} parent=0 // loop_footer_branch
    %9 = sbr.rel target = $region3
  $region8: #{basic_block_forward.3} parent=0 // loop_exit
    _

</llo_original>
